<compile_context>
chip_gen: v7x
topology: tpu7x:2x2x1
jax: 0.10.0
libtpu: 0.0.40
codegen_flags: <defaults>
</compile_context>

<pallas_src>
import math
import jax
import jax.numpy as jnp
from jax.experimental import pallas as pl
from jax.experimental.pallas import tpu as pltpu


def _vmem_capacity_bytes():
    """Best-effort physical VMEM query; conservative fallback."""
    try:
        info = pltpu.get_tpu_info()
        for attr in ("vmem_capacity_bytes", "vmem_size_bytes", "vmem_bytes"):
            v = getattr(info, attr, None)
            if v:
                return int(v)
    except Exception:
        pass
    return 64 * 2 ** 20


def _make_spatial_gate_kernel(H, W, taps, bt):
    """taps: static list of (dy, dx) offsets (order shared with the wrapper)."""

    def kernel(rowcol_ref, w1_ref, b1_ref, w2_ref, b2_ref, w3_ref, b3_ref,
               w4_ref, b4_ref, x_ref, o_ref):
        # rowcol_ref: (2, S) int32   flat-layout row / col indices (tail = big negative)
        # w1_ref:     (Cr, C)  input dtype   conv1 (+BN1) weight
        # b*_ref:     (Cr, 1)  f32           folded biases
        # w2/w3_ref:  (Cr, 9*Cr) f32         dilated-conv (+BN) packed weights
        # w4_ref:     (1, Cr)  f32 ; b4_ref: (1, 1) f32
        # x_ref:      (bt, C, S)   o_ref: (bt, 1, S)
        S = x_ref.shape[2]

        # ---- invariants, hoisted out of the per-image loop (once per grid step) ----
        w1 = w1_ref[...]
        b1 = b1_ref[...]
        w2 = w2_ref[...]
        b2 = b2_ref[...]
        w3 = w3_ref[...]
        b3 = b3_ref[...]
        w4 = w4_ref[...]
        b4 = b4_ref[...]

        rc = rowcol_ref[...]
        hh = rc[0:1, :]                      # (1, S)
        ww = rc[1:2, :]                      # (1, S)
        masks = []
        for (dy, dx) in taps:
            if dy == 0 and dx == 0:
                masks.append(None)           # center tap needs no mask / shift
            else:
                m = ((hh + dy >= 0) & (hh + dy < H) &
                     (ww + dx >= 0) & (ww + dx < W))
                masks.append(m.astype(jnp.float32))

        def dilated_conv3x3(h, w_pack, bias):
            # h: (Cr, S) f32.  Spatial shifts via XLU lane-rotate; wrapped /
            # out-of-image lanes are zeroed by the boundary masks, so valid
            # positions match the zero-padded dilated conv exactly.
            wins = []
            for t, (dy, dx) in enumerate(taps):
                off = dy * W + dx
                if off == 0:
                    wins.append(h)
                else:
                    shifted = pltpu.roll(h, shift=(-off) % S, axis=1)
                    wins.append(shifted * masks[t])
            stacked = jnp.concatenate(wins, axis=0)          # (9*Cr, S)
            out = jnp.dot(w_pack, stacked, preferred_element_type=jnp.float32)
            return jnp.maximum(out + bias, 0.0)

        def one_image(b, carry):
            x_img = x_ref[b]                                 # (C, S), input dtype
            h = jnp.dot(w1, x_img, preferred_element_type=jnp.float32)
            h = jnp.maximum(h + b1, 0.0)                     # (Cr, S) f32
            h = dilated_conv3x3(h, w2, b2)
            h = dilated_conv3x3(h, w3, b3)
            gate = jnp.dot(w4, h, preferred_element_type=jnp.float32) + b4
            o_ref[b] = gate.astype(o_ref.dtype)              # (1, S)
            return carry

        if bt == 1:
            one_image(0, 0)
        else:
            jax.lax.fori_loop(0, bt, one_image, 0)

    return kernel


def spatial_gate_forward(x, params, *, dilation_val=4, eps=1e-5):
    """x: (B, C, H, W); params: dict of conv/bn parameters (see __main__)."""
    B, C, H, W = x.shape
    HW = H * W
    S = ((HW + 127) // 128) * 128            # lane-dense flattened spatial length
    dil = dilation_val

    # ---- fold eval-mode BatchNorm into the preceding conv ----
    def fold(w, b, bn):
        s = bn['gamma'] / jnp.sqrt(bn['var'] + eps)
        wf = w * (s[:, None, None, None] if w.ndim == 4 else s[:, None])
        bf = s * (b - bn['mean']) + bn['beta']
        return wf.astype(jnp.float32), bf.astype(jnp.float32)

    w1f, b1f = fold(params['conv1_w'][:, :, 0, 0], params['conv1_b'], params['bn1'])
    w2f, b2f = fold(params['conv2_w'], params['conv2_b'], params['bn2'])
    w3f, b3f = fold(params['conv3_w'], params['conv3_b'], params['bn3'])
    Cr = w1f.shape[0]

    taps = [(dy, dx) for dy in (-dil, 0, dil) for dx in (-dil, 0, dil)]
    # pack the 3x3 dilated-conv weights so all 9 taps contract in ONE matmul:
    #   w_pack[o, t*Cr + i] = w[o, i, kh, kw]  with  t = kh*3 + kw
    w2p = jnp.transpose(w2f, (0, 2, 3, 1)).reshape(Cr, 9 * Cr)
    w3p = jnp.transpose(w3f, (0, 2, 3, 1)).reshape(Cr, 9 * Cr)
    w1x = w1f.astype(x.dtype)                # MXU-native input dtype; f32 accumulation
    b1c = b1f.reshape(Cr, 1)
    b2c = b2f.reshape(Cr, 1)
    b3c = b3f.reshape(Cr, 1)
    w4 = params['conv4_w'][:, :, 0, 0].astype(jnp.float32)   # (1, Cr)
    b4 = params['conv4_b'].reshape(1, 1).astype(jnp.float32)

    # tiny (2, S) int32 row/col index table; per-tap masks are built in-kernel.
    p = jnp.arange(S, dtype=jnp.int32)
    big = jnp.int32(-(2 ** 20))
    h_idx = jnp.where(p < HW, p // W, big)
    w_idx = jnp.where(p < HW, p % W, big)
    rowcol = jnp.stack([h_idx, w_idx], axis=0)               # (2, S)

    # ---- flatten spatial, pad to a multiple of 128 (unmasked lane-dense I/O) ----
    x_flat = x.reshape(B, C, HW)
    if S != HW:
        x_flat = jnp.pad(x_flat, ((0, 0), (0, 0), (0, S - HW)))

    # ---- generation-aware batch tiling ----
    itemsize = jnp.dtype(x.dtype).itemsize
    per_img_in = C * S * itemsize
    vmem_phys = _vmem_capacity_bytes()
    if vmem_phys >= 100 * 2 ** 20:           # v5e / v6e: 128 MiB VMEM
        target_block, vmem_cap = 8 * 2 ** 20, 96 * 2 ** 20
    else:                                    # v7x: 64 MiB per TensorCore
        target_block, vmem_cap = 4 * 2 ** 20, 40 * 2 ** 20
    bt_cap = max(1, target_block // per_img_in)
    divs = [d for d in range(1, B + 1) if B % d == 0 and d <= bt_cap]
    even_steps = [d for d in divs if (B // d) >= 2 and (B // d) % 2 == 0]
    multi_steps = [d for d in divs if (B // d) >= 2]
    bt = max(even_steps or multi_steps or divs)
    grid = (B // bt,)

    f32b = 4
    weights_bytes = (2 * S * 4 + Cr * C * itemsize + 2 * Cr * 9 * Cr * f32b
                     + (3 * Cr + 2) * f32b)
    scratch_per_img = (10 * Cr * S + 10 * S) * f32b          # h + stacked windows + masks
    need = (2 * bt * per_img_in + 2 * bt * S * itemsize
            + 2 * weights_bytes + 2 * scratch_per_img + (2 << 20))
    vmem_limit = int(min(vmem_cap, max(16 * 2 ** 20, need)))

    kernel = _make_spatial_gate_kernel(H, W, taps, bt)

    def const(shape):
        return pl.BlockSpec(shape, lambda i, _n=len(shape): (0,) * _n)

    gate_flat = pl.pallas_call(
        kernel,
        out_shape=jax.ShapeDtypeStruct((B, 1, S), x.dtype),
        grid=grid,
        in_specs=[
            const((2, S)),            # row/col index table
            const((Cr, C)),           # conv1 (+bn1) weight (input dtype)
            const((Cr, 1)),           # conv1 (+bn1) bias
            const((Cr, 9 * Cr)),      # conv2 (+bn2) packed weight
            const((Cr, 1)),
            const((Cr, 9 * Cr)),      # conv3 (+bn3) packed weight
            const((Cr, 1)),
            const((1, Cr)),           # final 1x1 conv weight
            const((1, 1)),            # final 1x1 conv bias
            pl.BlockSpec((bt, C, S), lambda i: (i, 0, 0)),    # x block
        ],
        out_specs=pl.BlockSpec((bt, 1, S), lambda i: (i, 0, 0)),  # gate only
        compiler_params=pltpu.CompilerParams(
            dimension_semantics=("parallel",),
            vmem_limit_bytes=vmem_limit,
        ),
    )(rowcol, w1x, b1c, w2p, b2c, w3p, b3c, w4, b4, x_flat)

    gate = gate_flat[:, :, :HW].reshape(B, 1, H, W)
    # expand_as: broadcast over channels OUTSIDE the kernel (no redundant HBM
    # writes from the kernel; XLA can fuse this into downstream consumers).
    return jnp.broadcast_to(gate, (B, C, H, W))


def _reference_spatial_gate(x, params, *, dilation_val=4, eps=1e-5):
    """Pure-JAX reference mirroring the PyTorch module in eval mode."""
    def conv(y, w, b, dil=1, pad=0):
        out = jax.lax.conv_general_dilated(
            y, w, window_strides=(1, 1),
            padding=((pad, pad), (pad, pad)),
            rhs_dilation=(dil, dil),
            dimension_numbers=('NCHW', 'OIHW', 'NCHW'))
        return out + b[None, :, None, None]

    def bn(y, pbn):
        s = pbn['gamma'] / jnp.sqrt(pbn['var'] + eps)
        return ((y - pbn['mean'][None, :, None, None]) * s[None, :, None, None]
                + pbn['beta'][None, :, None, None])

    h = jax.nn.relu(bn(conv(x, params['conv1_w'], params['conv1_b']), params['bn1']))
    h = jax.nn.relu(bn(conv(h, params['conv2_w'], params['conv2_b'],
                            dil=dilation_val, pad=dilation_val), params['bn2']))
    h = jax.nn.relu(bn(conv(h, params['conv3_w'], params['conv3_b'],
                            dil=dilation_val, pad=dilation_val), params['bn3']))
    g = conv(h, params['conv4_w'], params['conv4_b'])          # (B, 1, H, W)
    return jnp.broadcast_to(g, x.shape)


if __name__ == "__main__":
    key = jax.random.PRNGKey(0)
    reduction_ratio, dilation_val = 16, 4

    def conv_init(k, shape):
        fan_in = shape[1] * shape[2] * shape[3]
        bound = 1.0 / math.sqrt(fan_in)
        kw_, kb_ = jax.random.split(k)
        w = jax.random.uniform(kw_, shape, jnp.float32, -bound, bound)
        b = jax.random.uniform(kb_, (shape[0],), jnp.float32, -bound, bound)
        return w, b

    def bn_init(k, n):
        k1, k2, k3, k4 = jax.random.split(k, 4)
        return dict(
            gamma=jax.random.uniform(k1, (n,), jnp.float32, 0.5, 1.5),
            beta=0.1 * jax.random.normal(k2, (n,), jnp.float32),
            mean=0.1 * jax.random.normal(k3, (n,), jnp.float32),
            var=jax.random.uniform(k4, (n,), jnp.float32, 0.5, 1.5))

    def make_params(k, C):
        Cr = C // reduction_ratio
        ks = iter(jax.random.split(k, 8))
        w1, b1 = conv_init(next(ks), (Cr, C, 1, 1))
        w2, b2 = conv_init(next(ks), (Cr, Cr, 3, 3))
        w3, b3 = conv_init(next(ks), (Cr, Cr, 3, 3))
        w4, b4 = conv_init(next(ks), (1, Cr, 1, 1))
        return dict(conv1_w=w1, conv1_b=b1, bn1=bn_init(next(ks), Cr),
                    conv2_w=w2, conv2_b=b2, bn2=bn_init(next(ks), Cr),
                    conv3_w=w3, conv3_b=b3, bn3=bn_init(next(ks), Cr),
                    conv4_w=w4, conv4_b=b4)

    # Case 1: 16x16 image (flattened spatial is an exact multiple of 128).
    k1, k2, k3 = jax.random.split(key, 3)
    B, C, H, W = 2, 32, 16, 16
    params = make_params(k1, C)
    x = jax.random.normal(k2, (B, C, H, W), jnp.float32)
    out = jax.block_until_ready(
        spatial_gate_forward(x, params, dilation_val=dilation_val))
    ref = _reference_spatial_gate(x, params, dilation_val=dilation_val)
    assert out.shape == x.shape
    assert jnp.allclose(out, ref, atol=1e-4, rtol=1e-4), (
        "f32 16x16 mismatch vs reference, max abs diff = %g"
        % float(jnp.max(jnp.abs(out - ref))))

    # Case 2: 10x12 image -> lane-padded tail (exercises pltpu.roll + boundary
    # masks with S > H*W, as flagged in the review).
    B2, C2, H2, W2 = 2, 32, 10, 12
    params2 = make_params(k3, C2)
    x2 = jax.random.normal(jax.random.fold_in(key, 7), (B2, C2, H2, W2), jnp.float32)
    out2 = jax.block_until_ready(
        spatial_gate_forward(x2, params2, dilation_val=dilation_val))
    ref2 = _reference_spatial_gate(x2, params2, dilation_val=dilation_val)
    assert jnp.allclose(out2, ref2, atol=1e-4, rtol=1e-4), (
        "f32 10x12 mismatch vs reference, max abs diff = %g"
        % float(jnp.max(jnp.abs(out2 - ref2))))

    # Case 3: bf16 I/O (halves HBM traffic on this memory-bound op); conv1 runs
    # in bf16 on the MXU with f32 accumulation.
    out_bf16 = jax.block_until_ready(
        spatial_gate_forward(x.astype(jnp.bfloat16), params,
                             dilation_val=dilation_val))
    assert out_bf16.dtype == jnp.bfloat16
    err_bf16 = float(jnp.max(jnp.abs(out_bf16.astype(jnp.float32) - ref)))
    assert err_bf16 < 1e-1, "bf16 mismatch vs reference, max abs diff = %g" % err_bf16

    print("KERNEL_OK")
</pallas_src>

<mosaic_0001>
module attributes {stable_mosaic.version = 11 : i64} {
  func.func @kernel(%arg0: i32, %arg1: memref<2x256xi32, #tpu.memory_space<vmem>>, %arg2: memref<2x32xf32, #tpu.memory_space<vmem>>, %arg3: memref<2x1xf32, #tpu.memory_space<vmem>>, %arg4: memref<2x18xf32, #tpu.memory_space<vmem>>, %arg5: memref<2x1xf32, #tpu.memory_space<vmem>>, %arg6: memref<2x18xf32, #tpu.memory_space<vmem>>, %arg7: memref<2x1xf32, #tpu.memory_space<vmem>>, %arg8: memref<1x2xf32, #tpu.memory_space<vmem>>, %arg9: memref<1x1xf32, #tpu.memory_space<vmem>>, %arg10: memref<1x32x256xf32, #tpu.memory_space<vmem>>, %arg11: memref<1x1x256xf32, #tpu.memory_space<vmem>>) attributes {dimension_semantics = [#tpu.dimension_semantics<parallel>], iteration_bounds = array<i64: 2>, scalar_prefetch = 0 : i64, scratch_operands = 0 : i64, tpu.core_type = #tpu.core_type<tc>, window_params = [{pipeline_mode = #tpu.pipeline_mode<synchronous>, transform_indices = @transform_0, window_bounds = array<i64: 2, 256>}, {pipeline_mode = #tpu.pipeline_mode<synchronous>, transform_indices = @transform_1, window_bounds = array<i64: 2, 32>}, {pipeline_mode = #tpu.pipeline_mode<synchronous>, transform_indices = @transform_2, window_bounds = array<i64: 2, 1>}, {pipeline_mode = #tpu.pipeline_mode<synchronous>, transform_indices = @transform_3, window_bounds = array<i64: 2, 18>}, {pipeline_mode = #tpu.pipeline_mode<synchronous>, transform_indices = @transform_4, window_bounds = array<i64: 2, 1>}, {pipeline_mode = #tpu.pipeline_mode<synchronous>, transform_indices = @transform_5, window_bounds = array<i64: 2, 18>}, {pipeline_mode = #tpu.pipeline_mode<synchronous>, transform_indices = @transform_6, window_bounds = array<i64: 2, 1>}, {pipeline_mode = #tpu.pipeline_mode<synchronous>, transform_indices = @transform_7, window_bounds = array<i64: 1, 2>}, {pipeline_mode = #tpu.pipeline_mode<synchronous>, transform_indices = @transform_8, window_bounds = array<i64: 1, 1>}, {transform_indices = @transform_9, window_bounds = array<i64: 1, 32, 256>}, {transform_indices = @transform_10, window_bounds = array<i64: 1, 1, 256>}]} {
    %c0 = arith.constant 0 : index
    %c0_0 = arith.constant 0 : index
    %0 = vector.load %arg2[%c0, %c0_0] : memref<2x32xf32, #tpu.memory_space<vmem>>, vector<2x32xf32>
    %c0_1 = arith.constant 0 : index
    %c0_2 = arith.constant 0 : index
    %1 = vector.load %arg3[%c0_1, %c0_2] : memref<2x1xf32, #tpu.memory_space<vmem>>, vector<2x1xf32>
    %c0_3 = arith.constant 0 : index
    %c0_4 = arith.constant 0 : index
    %2 = vector.load %arg4[%c0_3, %c0_4] : memref<2x18xf32, #tpu.memory_space<vmem>>, vector<2x18xf32>
    %c0_5 = arith.constant 0 : index
    %c0_6 = arith.constant 0 : index
    %3 = vector.load %arg5[%c0_5, %c0_6] : memref<2x1xf32, #tpu.memory_space<vmem>>, vector<2x1xf32>
    %c0_7 = arith.constant 0 : index
    %c0_8 = arith.constant 0 : index
    %4 = vector.load %arg6[%c0_7, %c0_8] : memref<2x18xf32, #tpu.memory_space<vmem>>, vector<2x18xf32>
    %c0_9 = arith.constant 0 : index
    %c0_10 = arith.constant 0 : index
    %5 = vector.load %arg7[%c0_9, %c0_10] : memref<2x1xf32, #tpu.memory_space<vmem>>, vector<2x1xf32>
    %c0_11 = arith.constant 0 : index
    %c0_12 = arith.constant 0 : index
    %6 = vector.load %arg8[%c0_11, %c0_12] : memref<1x2xf32, #tpu.memory_space<vmem>>, vector<1x2xf32>
    %c0_13 = arith.constant 0 : index
    %c0_14 = arith.constant 0 : index
    %7 = vector.load %arg9[%c0_13, %c0_14] : memref<1x1xf32, #tpu.memory_space<vmem>>, vector<1x1xf32>
    %c0_15 = arith.constant 0 : index
    %c0_16 = arith.constant 0 : index
    %8 = vector.load %arg1[%c0_15, %c0_16] : memref<2x256xi32, #tpu.memory_space<vmem>>, vector<2x256xi32>
    %9 = vector.extract_strided_slice %8 {offsets = [0, 0], sizes = [1, 256], strides = [1, 1]} : vector<2x256xi32> to vector<1x256xi32>
    %10 = vector.extract_strided_slice %8 {offsets = [1, 0], sizes = [1, 256], strides = [1, 1]} : vector<2x256xi32> to vector<1x256xi32>
    %c-4_i32 = arith.constant -4 : i32
    %11 = vector.broadcast %c-4_i32 : i32 to vector<1x256xi32>
    %12 = arith.addi %9, %11 : vector<1x256xi32>
    %c0_i32 = arith.constant 0 : i32
    %13 = vector.broadcast %c0_i32 : i32 to vector<1x256xi32>
    %14 = arith.cmpi sge, %12, %13 : vector<1x256xi32>
    %c-4_i32_17 = arith.constant -4 : i32
    %15 = vector.broadcast %c-4_i32_17 : i32 to vector<1x256xi32>
    %16 = arith.addi %9, %15 : vector<1x256xi32>
    %c16_i32 = arith.constant 16 : i32
    %17 = vector.broadcast %c16_i32 : i32 to vector<1x256xi32>
    %18 = arith.cmpi slt, %16, %17 : vector<1x256xi32>
    %19 = arith.andi %14, %18 : vector<1x256xi1>
    %c-4_i32_18 = arith.constant -4 : i32
    %20 = vector.broadcast %c-4_i32_18 : i32 to vector<1x256xi32>
    %21 = arith.addi %10, %20 : vector<1x256xi32>
    %c0_i32_19 = arith.constant 0 : i32
    %22 = vector.broadcast %c0_i32_19 : i32 to vector<1x256xi32>
    %23 = arith.cmpi sge, %21, %22 : vector<1x256xi32>
    %24 = arith.andi %19, %23 : vector<1x256xi1>
    %c-4_i32_20 = arith.constant -4 : i32
    %25 = vector.broadcast %c-4_i32_20 : i32 to vector<1x256xi32>
    %26 = arith.addi %10, %25 : vector<1x256xi32>
    %c16_i32_21 = arith.constant 16 : i32
    %27 = vector.broadcast %c16_i32_21 : i32 to vector<1x256xi32>
    %28 = arith.cmpi slt, %26, %27 : vector<1x256xi32>
    %29 = arith.andi %24, %28 : vector<1x256xi1>
    %30 = arith.extui %29 : vector<1x256xi1> to vector<1x256xi32>
    %31 = arith.sitofp %30 : vector<1x256xi32> to vector<1x256xf32>
    %c-4_i32_22 = arith.constant -4 : i32
    %32 = vector.broadcast %c-4_i32_22 : i32 to vector<1x256xi32>
    %33 = arith.addi %9, %32 : vector<1x256xi32>
    %c0_i32_23 = arith.constant 0 : i32
    %34 = vector.broadcast %c0_i32_23 : i32 to vector<1x256xi32>
    %35 = arith.cmpi sge, %33, %34 : vector<1x256xi32>
    %c-4_i32_24 = arith.constant -4 : i32
    %36 = vector.broadcast %c-4_i32_24 : i32 to vector<1x256xi32>
    %37 = arith.addi %9, %36 : vector<1x256xi32>
    %c16_i32_25 = arith.constant 16 : i32
    %38 = vector.broadcast %c16_i32_25 : i32 to vector<1x256xi32>
    %39 = arith.cmpi slt, %37, %38 : vector<1x256xi32>
    %40 = arith.andi %35, %39 : vector<1x256xi1>
    %c0_i32_26 = arith.constant 0 : i32
    %41 = vector.broadcast %c0_i32_26 : i32 to vector<1x256xi32>
    %42 = arith.addi %10, %41 : vector<1x256xi32>
    %c0_i32_27 = arith.constant 0 : i32
    %43 = vector.broadcast %c0_i32_27 : i32 to vector<1x256xi32>
    %44 = arith.cmpi sge, %42, %43 : vector<1x256xi32>
    %45 = arith.andi %40, %44 : vector<1x256xi1>
    %c0_i32_28 = arith.constant 0 : i32
    %46 = vector.broadcast %c0_i32_28 : i32 to vector<1x256xi32>
    %47 = arith.addi %10, %46 : vector<1x256xi32>
    %c16_i32_29 = arith.constant 16 : i32
    %48 = vector.broadcast %c16_i32_29 : i32 to vector<1x256xi32>
    %49 = arith.cmpi slt, %47, %48 : vector<1x256xi32>
    %50 = arith.andi %45, %49 : vector<1x256xi1>
    %51 = arith.extui %50 : vector<1x256xi1> to vector<1x256xi32>
    %52 = arith.sitofp %51 : vector<1x256xi32> to vector<1x256xf32>
    %c-4_i32_30 = arith.constant -4 : i32
    %53 = vector.broadcast %c-4_i32_30 : i32 to vector<1x256xi32>
    %54 = arith.addi %9, %53 : vector<1x256xi32>
    %c0_i32_31 = arith.constant 0 : i32
    %55 = vector.broadcast %c0_i32_31 : i32 to vector<1x256xi32>
    %56 = arith.cmpi sge, %54, %55 : vector<1x256xi32>
    %c-4_i32_32 = arith.constant -4 : i32
    %57 = vector.broadcast %c-4_i32_32 : i32 to vector<1x256xi32>
    %58 = arith.addi %9, %57 : vector<1x256xi32>
    %c16_i32_33 = arith.constant 16 : i32
    %59 = vector.broadcast %c16_i32_33 : i32 to vector<1x256xi32>
    %60 = arith.cmpi slt, %58, %59 : vector<1x256xi32>
    %61 = arith.andi %56, %60 : vector<1x256xi1>
    %c4_i32 = arith.constant 4 : i32
    %62 = vector.broadcast %c4_i32 : i32 to vector<1x256xi32>
    %63 = arith.addi %10, %62 : vector<1x256xi32>
    %c0_i32_34 = arith.constant 0 : i32
    %64 = vector.broadcast %c0_i32_34 : i32 to vector<1x256xi32>
    %65 = arith.cmpi sge, %63, %64 : vector<1x256xi32>
    %66 = arith.andi %61, %65 : vector<1x256xi1>
    %c4_i32_35 = arith.constant 4 : i32
    %67 = vector.broadcast %c4_i32_35 : i32 to vector<1x256xi32>
    %68 = arith.addi %10, %67 : vector<1x256xi32>
    %c16_i32_36 = arith.constant 16 : i32
    %69 = vector.broadcast %c16_i32_36 : i32 to vector<1x256xi32>
    %70 = arith.cmpi slt, %68, %69 : vector<1x256xi32>
    %71 = arith.andi %66, %70 : vector<1x256xi1>
    %72 = arith.extui %71 : vector<1x256xi1> to vector<1x256xi32>
    %73 = arith.sitofp %72 : vector<1x256xi32> to vector<1x256xf32>
    %c0_i32_37 = arith.constant 0 : i32
    %74 = vector.broadcast %c0_i32_37 : i32 to vector<1x256xi32>
    %75 = arith.addi %9, %74 : vector<1x256xi32>
    %c0_i32_38 = arith.constant 0 : i32
    %76 = vector.broadcast %c0_i32_38 : i32 to vector<1x256xi32>
    %77 = arith.cmpi sge, %75, %76 : vector<1x256xi32>
    %c0_i32_39 = arith.constant 0 : i32
    %78 = vector.broadcast %c0_i32_39 : i32 to vector<1x256xi32>
    %79 = arith.addi %9, %78 : vector<1x256xi32>
    %c16_i32_40 = arith.constant 16 : i32
    %80 = vector.broadcast %c16_i32_40 : i32 to vector<1x256xi32>
    %81 = arith.cmpi slt, %79, %80 : vector<1x256xi32>
    %82 = arith.andi %77, %81 : vector<1x256xi1>
    %c-4_i32_41 = arith.constant -4 : i32
    %83 = vector.broadcast %c-4_i32_41 : i32 to vector<1x256xi32>
    %84 = arith.addi %10, %83 : vector<1x256xi32>
    %c0_i32_42 = arith.constant 0 : i32
    %85 = vector.broadcast %c0_i32_42 : i32 to vector<1x256xi32>
    %86 = arith.cmpi sge, %84, %85 : vector<1x256xi32>
    %87 = arith.andi %82, %86 : vector<1x256xi1>
    %c-4_i32_43 = arith.constant -4 : i32
    %88 = vector.broadcast %c-4_i32_43 : i32 to vector<1x256xi32>
    %89 = arith.addi %10, %88 : vector<1x256xi32>
    %c16_i32_44 = arith.constant 16 : i32
    %90 = vector.broadcast %c16_i32_44 : i32 to vector<1x256xi32>
    %91 = arith.cmpi slt, %89, %90 : vector<1x256xi32>
    %92 = arith.andi %87, %91 : vector<1x256xi1>
    %93 = arith.extui %92 : vector<1x256xi1> to vector<1x256xi32>
    %94 = arith.sitofp %93 : vector<1x256xi32> to vector<1x256xf32>
    %c0_i32_45 = arith.constant 0 : i32
    %95 = vector.broadcast %c0_i32_45 : i32 to vector<1x256xi32>
    %96 = arith.addi %9, %95 : vector<1x256xi32>
    %c0_i32_46 = arith.constant 0 : i32
    %97 = vector.broadcast %c0_i32_46 : i32 to vector<1x256xi32>
    %98 = arith.cmpi sge, %96, %97 : vector<1x256xi32>
    %c0_i32_47 = arith.constant 0 : i32
    %99 = vector.broadcast %c0_i32_47 : i32 to vector<1x256xi32>
    %100 = arith.addi %9, %99 : vector<1x256xi32>
    %c16_i32_48 = arith.constant 16 : i32
    %101 = vector.broadcast %c16_i32_48 : i32 to vector<1x256xi32>
    %102 = arith.cmpi slt, %100, %101 : vector<1x256xi32>
    %103 = arith.andi %98, %102 : vector<1x256xi1>
    %c4_i32_49 = arith.constant 4 : i32
    %104 = vector.broadcast %c4_i32_49 : i32 to vector<1x256xi32>
    %105 = arith.addi %10, %104 : vector<1x256xi32>
    %c0_i32_50 = arith.constant 0 : i32
    %106 = vector.broadcast %c0_i32_50 : i32 to vector<1x256xi32>
    %107 = arith.cmpi sge, %105, %106 : vector<1x256xi32>
    %108 = arith.andi %103, %107 : vector<1x256xi1>
    %c4_i32_51 = arith.constant 4 : i32
    %109 = vector.broadcast %c4_i32_51 : i32 to vector<1x256xi32>
    %110 = arith.addi %10, %109 : vector<1x256xi32>
    %c16_i32_52 = arith.constant 16 : i32
    %111 = vector.broadcast %c16_i32_52 : i32 to vector<1x256xi32>
    %112 = arith.cmpi slt, %110, %111 : vector<1x256xi32>
    %113 = arith.andi %108, %112 : vector<1x256xi1>
    %114 = arith.extui %113 : vector<1x256xi1> to vector<1x256xi32>
    %115 = arith.sitofp %114 : vector<1x256xi32> to vector<1x256xf32>
    %c4_i32_53 = arith.constant 4 : i32
    %116 = vector.broadcast %c4_i32_53 : i32 to vector<1x256xi32>
    %117 = arith.addi %9, %116 : vector<1x256xi32>
    %c0_i32_54 = arith.constant 0 : i32
    %118 = vector.broadcast %c0_i32_54 : i32 to vector<1x256xi32>
    %119 = arith.cmpi sge, %117, %118 : vector<1x256xi32>
    %c4_i32_55 = arith.constant 4 : i32
    %120 = vector.broadcast %c4_i32_55 : i32 to vector<1x256xi32>
    %121 = arith.addi %9, %120 : vector<1x256xi32>
    %c16_i32_56 = arith.constant 16 : i32
    %122 = vector.broadcast %c16_i32_56 : i32 to vector<1x256xi32>
    %123 = arith.cmpi slt, %121, %122 : vector<1x256xi32>
    %124 = arith.andi %119, %123 : vector<1x256xi1>
    %c-4_i32_57 = arith.constant -4 : i32
    %125 = vector.broadcast %c-4_i32_57 : i32 to vector<1x256xi32>
    %126 = arith.addi %10, %125 : vector<1x256xi32>
    %c0_i32_58 = arith.constant 0 : i32
    %127 = vector.broadcast %c0_i32_58 : i32 to vector<1x256xi32>
    %128 = arith.cmpi sge, %126, %127 : vector<1x256xi32>
    %129 = arith.andi %124, %128 : vector<1x256xi1>
    %c-4_i32_59 = arith.constant -4 : i32
    %130 = vector.broadcast %c-4_i32_59 : i32 to vector<1x256xi32>
    %131 = arith.addi %10, %130 : vector<1x256xi32>
    %c16_i32_60 = arith.constant 16 : i32
    %132 = vector.broadcast %c16_i32_60 : i32 to vector<1x256xi32>
    %133 = arith.cmpi slt, %131, %132 : vector<1x256xi32>
    %134 = arith.andi %129, %133 : vector<1x256xi1>
    %135 = arith.extui %134 : vector<1x256xi1> to vector<1x256xi32>
    %136 = arith.sitofp %135 : vector<1x256xi32> to vector<1x256xf32>
    %c4_i32_61 = arith.constant 4 : i32
    %137 = vector.broadcast %c4_i32_61 : i32 to vector<1x256xi32>
    %138 = arith.addi %9, %137 : vector<1x256xi32>
    %c0_i32_62 = arith.constant 0 : i32
    %139 = vector.broadcast %c0_i32_62 : i32 to vector<1x256xi32>
    %140 = arith.cmpi sge, %138, %139 : vector<1x256xi32>
    %c4_i32_63 = arith.constant 4 : i32
    %141 = vector.broadcast %c4_i32_63 : i32 to vector<1x256xi32>
    %142 = arith.addi %9, %141 : vector<1x256xi32>
    %c16_i32_64 = arith.constant 16 : i32
    %143 = vector.broadcast %c16_i32_64 : i32 to vector<1x256xi32>
    %144 = arith.cmpi slt, %142, %143 : vector<1x256xi32>
    %145 = arith.andi %140, %144 : vector<1x256xi1>
    %c0_i32_65 = arith.constant 0 : i32
    %146 = vector.broadcast %c0_i32_65 : i32 to vector<1x256xi32>
    %147 = arith.addi %10, %146 : vector<1x256xi32>
    %c0_i32_66 = arith.constant 0 : i32
    %148 = vector.broadcast %c0_i32_66 : i32 to vector<1x256xi32>
    %149 = arith.cmpi sge, %147, %148 : vector<1x256xi32>
    %150 = arith.andi %145, %149 : vector<1x256xi1>
    %c0_i32_67 = arith.constant 0 : i32
    %151 = vector.broadcast %c0_i32_67 : i32 to vector<1x256xi32>
    %152 = arith.addi %10, %151 : vector<1x256xi32>
    %c16_i32_68 = arith.constant 16 : i32
    %153 = vector.broadcast %c16_i32_68 : i32 to vector<1x256xi32>
    %154 = arith.cmpi slt, %152, %153 : vector<1x256xi32>
    %155 = arith.andi %150, %154 : vector<1x256xi1>
    %156 = arith.extui %155 : vector<1x256xi1> to vector<1x256xi32>
    %157 = arith.sitofp %156 : vector<1x256xi32> to vector<1x256xf32>
    %c4_i32_69 = arith.constant 4 : i32
    %158 = vector.broadcast %c4_i32_69 : i32 to vector<1x256xi32>
    %159 = arith.addi %9, %158 : vector<1x256xi32>
    %c0_i32_70 = arith.constant 0 : i32
    %160 = vector.broadcast %c0_i32_70 : i32 to vector<1x256xi32>
    %161 = arith.cmpi sge, %159, %160 : vector<1x256xi32>
    %c4_i32_71 = arith.constant 4 : i32
    %162 = vector.broadcast %c4_i32_71 : i32 to vector<1x256xi32>
    %163 = arith.addi %9, %162 : vector<1x256xi32>
    %c16_i32_72 = arith.constant 16 : i32
    %164 = vector.broadcast %c16_i32_72 : i32 to vector<1x256xi32>
    %165 = arith.cmpi slt, %163, %164 : vector<1x256xi32>
    %166 = arith.andi %161, %165 : vector<1x256xi1>
    %c4_i32_73 = arith.constant 4 : i32
    %167 = vector.broadcast %c4_i32_73 : i32 to vector<1x256xi32>
    %168 = arith.addi %10, %167 : vector<1x256xi32>
    %c0_i32_74 = arith.constant 0 : i32
    %169 = vector.broadcast %c0_i32_74 : i32 to vector<1x256xi32>
    %170 = arith.cmpi sge, %168, %169 : vector<1x256xi32>
    %171 = arith.andi %166, %170 : vector<1x256xi1>
    %c4_i32_75 = arith.constant 4 : i32
    %172 = vector.broadcast %c4_i32_75 : i32 to vector<1x256xi32>
    %173 = arith.addi %10, %172 : vector<1x256xi32>
    %c16_i32_76 = arith.constant 16 : i32
    %174 = vector.broadcast %c16_i32_76 : i32 to vector<1x256xi32>
    %175 = arith.cmpi slt, %173, %174 : vector<1x256xi32>
    %176 = arith.andi %171, %175 : vector<1x256xi1>
    %177 = arith.extui %176 : vector<1x256xi1> to vector<1x256xi32>
    %178 = arith.sitofp %177 : vector<1x256xi32> to vector<1x256xf32>
    %c0_77 = arith.constant 0 : index
    %c0_78 = arith.constant 0 : index
    %c0_79 = arith.constant 0 : index
    %179 = vector.load %arg10[%c0_77, %c0_78, %c0_79] : memref<1x32x256xf32, #tpu.memory_space<vmem>>, vector<1x32x256xf32>
    %180 = vector.shape_cast %179 : vector<1x32x256xf32> to vector<32x256xf32>
    %cst = arith.constant dense<0.000000e+00> : vector<2x256xf32>
    %181 = tpu.matmul %0, %180, %cst {dimension_numbers = #tpu.dot_dimension_numbers<[1], [0], [0], [1], [0, 0, 1, 1], [], []>} : vector<2x32xf32>, vector<32x256xf32>, vector<2x256xf32> -> vector<2x256xf32>
    %182 = vector.broadcast %1 : vector<2x1xf32> to vector<2x256xf32>
    %183 = arith.addf %181, %182 : vector<2x256xf32>
    %cst_80 = arith.constant 0.000000e+00 : f32
    %184 = vector.broadcast %cst_80 : f32 to vector<2x256xf32>
    %185 = arith.maximumf %183, %184 : vector<2x256xf32>
    %c68_i32 = arith.constant 68 : i32
    %186 = tpu.dynamic_rotate %185 by %c68_i32 dim 1 : vector<2x256xf32>, i32 -> vector<2x256xf32>
    %187 = vector.broadcast %31 : vector<1x256xf32> to vector<2x256xf32>
    %188 = arith.mulf %186, %187 : vector<2x256xf32>
    %c64_i32 = arith.constant 64 : i32
    %189 = tpu.dynamic_rotate %185 by %c64_i32 dim 1 : vector<2x256xf32>, i32 -> vector<2x256xf32>
    %190 = vector.broadcast %52 : vector<1x256xf32> to vector<2x256xf32>
    %191 = arith.mulf %189, %190 : vector<2x256xf32>
    %c60_i32 = arith.constant 60 : i32
    %192 = tpu.dynamic_rotate %185 by %c60_i32 dim 1 : vector<2x256xf32>, i32 -> vector<2x256xf32>
    %193 = vector.broadcast %73 : vector<1x256xf32> to vector<2x256xf32>
    %194 = arith.mulf %192, %193 : vector<2x256xf32>
    %c4_i32_81 = arith.constant 4 : i32
    %195 = tpu.dynamic_rotate %185 by %c4_i32_81 dim 1 : vector<2x256xf32>, i32 -> vector<2x256xf32>
    %196 = vector.broadcast %94 : vector<1x256xf32> to vector<2x256xf32>
    %197 = arith.mulf %195, %196 : vector<2x256xf32>
    %c252_i32 = arith.constant 252 : i32
    %198 = tpu.dynamic_rotate %185 by %c252_i32 dim 1 : vector<2x256xf32>, i32 -> vector<2x256xf32>
    %199 = vector.broadcast %115 : vector<1x256xf32> to vector<2x256xf32>
    %200 = arith.mulf %198, %199 : vector<2x256xf32>
    %c196_i32 = arith.constant 196 : i32
    %201 = tpu.dynamic_rotate %185 by %c196_i32 dim 1 : vector<2x256xf32>, i32 -> vector<2x256xf32>
    %202 = vector.broadcast %136 : vector<1x256xf32> to vector<2x256xf32>
    %203 = arith.mulf %201, %202 : vector<2x256xf32>
    %c192_i32 = arith.constant 192 : i32
    %204 = tpu.dynamic_rotate %185 by %c192_i32 dim 1 : vector<2x256xf32>, i32 -> vector<2x256xf32>
    %205 = vector.broadcast %157 : vector<1x256xf32> to vector<2x256xf32>
    %206 = arith.mulf %204, %205 : vector<2x256xf32>
    %c188_i32 = arith.constant 188 : i32
    %207 = tpu.dynamic_rotate %185 by %c188_i32 dim 1 : vector<2x256xf32>, i32 -> vector<2x256xf32>
    %208 = vector.broadcast %178 : vector<1x256xf32> to vector<2x256xf32>
    %209 = arith.mulf %207, %208 : vector<2x256xf32>
    %210 = tpu.concatenate %188, %191, %194, %197, %185, %200, %203, %206, %209 in 0 : vector<2x256xf32>, vector<2x256xf32>, vector<2x256xf32>, vector<2x256xf32>, vector<2x256xf32>, vector<2x256xf32>, vector<2x256xf32>, vector<2x256xf32>, vector<2x256xf32> -> vector<18x256xf32>
    %cst_82 = arith.constant dense<0.000000e+00> : vector<2x256xf32>
    %211 = tpu.matmul %2, %210, %cst_82 {dimension_numbers = #tpu.dot_dimension_numbers<[1], [0], [0], [1], [0, 0, 1, 1], [], []>} : vector<2x18xf32>, vector<18x256xf32>, vector<2x256xf32> -> vector<2x256xf32>
    %212 = vector.broadcast %3 : vector<2x1xf32> to vector<2x256xf32>
    %213 = arith.addf %211, %212 : vector<2x256xf32>
    %cst_83 = arith.constant 0.000000e+00 : f32
    %214 = vector.broadcast %cst_83 : f32 to vector<2x256xf32>
    %215 = arith.maximumf %213, %214 : vector<2x256xf32>
    %c68_i32_84 = arith.constant 68 : i32
    %216 = tpu.dynamic_rotate %215 by %c68_i32_84 dim 1 : vector<2x256xf32>, i32 -> vector<2x256xf32>
    %217 = vector.broadcast %31 : vector<1x256xf32> to vector<2x256xf32>
    %218 = arith.mulf %216, %217 : vector<2x256xf32>
    %c64_i32_85 = arith.constant 64 : i32
    %219 = tpu.dynamic_rotate %215 by %c64_i32_85 dim 1 : vector<2x256xf32>, i32 -> vector<2x256xf32>
    %220 = vector.broadcast %52 : vector<1x256xf32> to vector<2x256xf32>
    %221 = arith.mulf %219, %220 : vector<2x256xf32>
    %c60_i32_86 = arith.constant 60 : i32
    %222 = tpu.dynamic_rotate %215 by %c60_i32_86 dim 1 : vector<2x256xf32>, i32 -> vector<2x256xf32>
    %223 = vector.broadcast %73 : vector<1x256xf32> to vector<2x256xf32>
    %224 = arith.mulf %222, %223 : vector<2x256xf32>
    %c4_i32_87 = arith.constant 4 : i32
    %225 = tpu.dynamic_rotate %215 by %c4_i32_87 dim 1 : vector<2x256xf32>, i32 -> vector<2x256xf32>
    %226 = vector.broadcast %94 : vector<1x256xf32> to vector<2x256xf32>
    %227 = arith.mulf %225, %226 : vector<2x256xf32>
    %c252_i32_88 = arith.constant 252 : i32
    %228 = tpu.dynamic_rotate %215 by %c252_i32_88 dim 1 : vector<2x256xf32>, i32 -> vector<2x256xf32>
    %229 = vector.broadcast %115 : vector<1x256xf32> to vector<2x256xf32>
    %230 = arith.mulf %228, %229 : vector<2x256xf32>
    %c196_i32_89 = arith.constant 196 : i32
    %231 = tpu.dynamic_rotate %215 by %c196_i32_89 dim 1 : vector<2x256xf32>, i32 -> vector<2x256xf32>
    %232 = vector.broadcast %136 : vector<1x256xf32> to vector<2x256xf32>
    %233 = arith.mulf %231, %232 : vector<2x256xf32>
    %c192_i32_90 = arith.constant 192 : i32
    %234 = tpu.dynamic_rotate %215 by %c192_i32_90 dim 1 : vector<2x256xf32>, i32 -> vector<2x256xf32>
    %235 = vector.broadcast %157 : vector<1x256xf32> to vector<2x256xf32>
    %236 = arith.mulf %234, %235 : vector<2x256xf32>
    %c188_i32_91 = arith.constant 188 : i32
    %237 = tpu.dynamic_rotate %215 by %c188_i32_91 dim 1 : vector<2x256xf32>, i32 -> vector<2x256xf32>
    %238 = vector.broadcast %178 : vector<1x256xf32> to vector<2x256xf32>
    %239 = arith.mulf %237, %238 : vector<2x256xf32>
    %240 = tpu.concatenate %218, %221, %224, %227, %215, %230, %233, %236, %239 in 0 : vector<2x256xf32>, vector<2x256xf32>, vector<2x256xf32>, vector<2x256xf32>, vector<2x256xf32>, vector<2x256xf32>, vector<2x256xf32>, vector<2x256xf32>, vector<2x256xf32> -> vector<18x256xf32>
    %cst_92 = arith.constant dense<0.000000e+00> : vector<2x256xf32>
    %241 = tpu.matmul %4, %240, %cst_92 {dimension_numbers = #tpu.dot_dimension_numbers<[1], [0], [0], [1], [0, 0, 1, 1], [], []>} : vector<2x18xf32>, vector<18x256xf32>, vector<2x256xf32> -> vector<2x256xf32>
    %242 = vector.broadcast %5 : vector<2x1xf32> to vector<2x256xf32>
    %243 = arith.addf %241, %242 : vector<2x256xf32>
    %cst_93 = arith.constant 0.000000e+00 : f32
    %244 = vector.broadcast %cst_93 : f32 to vector<2x256xf32>
    %245 = arith.maximumf %243, %244 : vector<2x256xf32>
    %cst_94 = arith.constant dense<0.000000e+00> : vector<1x256xf32>
    %246 = tpu.matmul %6, %245, %cst_94 {dimension_numbers = #tpu.dot_dimension_numbers<[1], [0], [0], [1], [0, 0, 1, 1], [], []>} : vector<1x2xf32>, vector<2x256xf32>, vector<1x256xf32> -> vector<1x256xf32>
    %247 = vector.broadcast %7 : vector<1x1xf32> to vector<1x256xf32>
    %248 = arith.addf %246, %247 : vector<1x256xf32>
    %c0_95 = arith.constant 0 : index
    %c0_96 = arith.constant 0 : index
    %c0_97 = arith.constant 0 : index
    %249 = vector.load %arg11[%c0_95, %c0_96, %c0_97] : memref<1x1x256xf32, #tpu.memory_space<vmem>>, vector<1x1x256xf32>
    %250 = vector.shape_cast %249 : vector<1x1x256xf32> to vector<1x256xf32>
    %251 = vector.shape_cast %248 : vector<1x256xf32> to vector<1x1x256xf32>
    tpu.vector_store %arg11[%c0_95, %c0_96, %c0_97], %251 {strides = array<i32>} : memref<1x1x256xf32, #tpu.memory_space<vmem>>, vector<1x1x256xf32>,
    return
  }
  func.func @transform_0(%arg0: i32) -> (i32, i32) {
    %c0_i32 = arith.constant 0 : i32
    %c0_i32_0 = arith.constant 0 : i32
    %c0_i32_1 = arith.constant 0 : i32
    return %c0_i32, %c0_i32_0 : i32, i32
  }
  func.func @transform_1(%arg0: i32) -> (i32, i32) {
    %c0_i32 = arith.constant 0 : i32
    %c0_i32_0 = arith.constant 0 : i32
    %c0_i32_1 = arith.constant 0 : i32
    return %c0_i32, %c0_i32_0 : i32, i32
  }
  func.func @transform_2(%arg0: i32) -> (i32, i32) {
    %c0_i32 = arith.constant 0 : i32
    %c0_i32_0 = arith.constant 0 : i32
    %c0_i32_1 = arith.constant 0 : i32
    return %c0_i32, %c0_i32_0 : i32, i32
  }
  func.func @transform_3(%arg0: i32) -> (i32, i32) {
    %c0_i32 = arith.constant 0 : i32
    %c0_i32_0 = arith.constant 0 : i32
    %c0_i32_1 = arith.constant 0 : i32
    return %c0_i32, %c0_i32_0 : i32, i32
  }
  func.func @transform_4(%arg0: i32) -> (i32, i32) {
    %c0_i32 = arith.constant 0 : i32
    %c0_i32_0 = arith.constant 0 : i32
    %c0_i32_1 = arith.constant 0 : i32
    return %c0_i32, %c0_i32_0 : i32, i32
  }
  func.func @transform_5(%arg0: i32) -> (i32, i32) {
    %c0_i32 = arith.constant 0 : i32
    %c0_i32_0 = arith.constant 0 : i32
    %c0_i32_1 = arith.constant 0 : i32
    return %c0_i32, %c0_i32_0 : i32, i32
  }
  func.func @transform_6(%arg0: i32) -> (i32, i32) {
    %c0_i32 = arith.constant 0 : i32
    %c0_i32_0 = arith.constant 0 : i32
    %c0_i32_1 = arith.constant 0 : i32
    return %c0_i32, %c0_i32_0 : i32, i32
  }
  func.func @transform_7(%arg0: i32) -> (i32, i32) {
    %c0_i32 = arith.constant 0 : i32
    %c0_i32_0 = arith.constant 0 : i32
    %c0_i32_1 = arith.constant 0 : i32
    return %c0_i32, %c0_i32_0 : i32, i32
  }
  func.func @transform_8(%arg0: i32) -> (i32, i32) {
    %c0_i32 = arith.constant 0 : i32
    %c0_i32_0 = arith.constant 0 : i32
    %c0_i32_1 = arith.constant 0 : i32
    return %c0_i32, %c0_i32_0 : i32, i32
  }
  func.func @transform_9(%arg0: i32) -> (i32, i32, i32) {
    %c0_i32 = arith.constant 0 : i32
    %c0_i32_0 = arith.constant 0 : i32
    %c0_i32_1 = arith.constant 0 : i32
    return %arg0, %c0_i32, %c0_i32_0 : i32, i32, i32
  }
  func.func @transform_10(%arg0: i32) -> (i32, i32, i32) {
    %c0_i32 = arith.constant 0 : i32
    %c0_i32_0 = arith.constant 0 : i32
    %c0_i32_1 = arith.constant 0 : i32
    return %arg0, %c0_i32, %c0_i32_0 : i32, i32, i32
  }
}

</mosaic_0001>

<llo_original>
// kernel: tpu_custom_call.1
$region0: #{tpu_custom_call.1}
  #allocation0 [shape = 'u32[]', space=smem, size = 0x4, offset = 0x4, fixed_abs, tag = 'smem constant byte address 0x4 - core index']
  #allocation1 [shape = 'u32[144,128]{1,0:T(1,128)}', space=vmem, size = 0x12000, scoped, tag = 'internal scratch']
  #allocation2 [shape = 'f32[1,1]{1,0:T(1,128)S(1)}', space=vmem, size = 0x200, scoped, tag = 'scoped memory for tpu_custom_call.1']
  %s0 = inlined_call_operand.vmem [shape: s32[2,256], index: 0, kind: input, shape index: {}]
  %s1 = inlined_call_operand.vmem [shape: f32[2,32], index: 1, kind: input, shape index: {}]
  %s2 = inlined_call_operand.vmem [shape: f32[2,1], index: 2, kind: input, shape index: {}]
  %s3 = inlined_call_operand.vmem [shape: f32[2,18], index: 3, kind: input, shape index: {}]
  %s4 = inlined_call_operand.vmem [shape: f32[2,1], index: 4, kind: input, shape index: {}]
  %s5 = inlined_call_operand.vmem [shape: f32[2,18], index: 5, kind: input, shape index: {}]
  %s6 = inlined_call_operand.vmem [shape: f32[2,1], index: 6, kind: input, shape index: {}]
  %s7 = inlined_call_operand.vmem [shape: f32[1,2], index: 7, kind: input, shape index: {}]
  %s8 = inlined_call_operand.<no memory space> [shape: f32[1,1], index: 8, kind: input, shape index: {}]
  %s9 = inlined_call_operand.hbm [shape: f32[2,32,256], index: 9, kind: input, shape index: {}]
  %s10 = inlined_call_operand.hbm [shape: f32[2,1,256], index: 10, kind: output, shape index: {}]
  %s11 = sld [smem:[#allocation0]]
  $region77: #{tpu_custom_call.1} parent=0
    _
  %s13 = ssub.s32 1, %s11
  %s14 = scalar_select 0, %s13, %s11
  %v15 = vstv %s8
  %16 = vst [vmem:[#allocation2] sm:$0x1] %v15
  $region1: #{tpu_custom_call.1} parent=0
    #allocation3 [shape = 'u8[65536]{0}', space=vmem, size = 0x10000, scoped, tag = 'input window, operand 9']
    #allocation4 [shape = 's32[2]{0}', space=sflag, size = 0x8, scoped, tag = 'scoped memory for tpu_custom_call.1']
    #allocation5 [shape = 's32[2]{0}', space=sflag, size = 0x8, scoped, tag = 'scoped memory for tpu_custom_call.1']
    #allocation6 [shape = 'u8[2048]{0}', space=vmem, size = 0x800, scoped, tag = 'output window, operand 0']
    %17 = vsyncpa [#allocation4], 0
    %s18 = scalar_lea.sflag [#allocation4], 1
    %19 = vsyncpa %s18, 0
    %20 = vsyncpa [#allocation5], 0
    %s21 = scalar_lea.sflag [#allocation5], 1
    %22 = vsyncpa %s21, 0
    loop: start=0, step=1, limit=4
    $region2: #{tpu_custom_call.1} parent=1 // loop_pre_header
      _
    $region3: #{tpu_custom_call.1} parent=1 // loop_header
      %s24 = sphi 0, %s28
      %p25 = scmp.ge.s32.totalorder %s24, 4
      %s32 = sphi 0, %s32
      %s34 = sphi 0, %s32
      %s35 = sphi 0, %s34
      %s49 = sphi 0, %s35
      %s53 = sphi 0, %s53
      %s55 = sphi 0, %s53
      %s56 = sphi 0, %s55
      %s70 = sphi 0, %s56
      %s74 = sphi 0, %s74
      %s76 = sphi 0, %s74
      %s77 = sphi 0, %s76
      %s91 = sphi 0, %s77
      %s95 = sphi 0, %s95
      %s97 = sphi 0, %s95
      %s98 = sphi 0, %s97
      %s112 = sphi 0, %s98
      %s116 = sphi 0, %s116
      %s118 = sphi 0, %s116
      %s119 = sphi 0, %s118
      %s133 = sphi 0, %s119
      %s137 = sphi 0, %s137
      %s139 = sphi 0, %s137
      %s140 = sphi 0, %s139
      %s154 = sphi 0, %s140
      %s158 = sphi 0, %s158
      %s160 = sphi 0, %s158
      %s161 = sphi 0, %s160
      %s175 = sphi 0, %s161
      %s179 = sphi 0, %s179
      %s181 = sphi 0, %s179
      %s182 = sphi 0, %s181
      %s196 = sphi 0, %s182
      %s200 = sphi 0, %s200
      %s202 = sphi 0, %s200
      %s203 = sphi 0, %s202
      %s217 = sphi 0, %s203
      %s223 = sphi 0, %s225
      %s226 = sphi 0, %s223
      %s227 = sphi 0, %s226
      %s243 = sphi 0, %s227
      %s249 = sphi 0, %s251
      %s252 = sphi 0, %s249
      %s253 = sphi 0, %s252
      %s269 = sphi 0, %s253
    $region4: #{tpu_custom_call.1} parent=1 // loop_header_branch
      %27 = sbr.rel (%p25) target = $region8
    $region5: #{tpu_custom_call.1} parent=1 // loop_body
      %s29 = ssub.s32 %s24, 1
      %s30 = ssub.s32 %s24, 2
      %s31 = sadd.s32 %s24, 1
      %s33 = sadd.s32 %s32, 1
      %p36 = scmp.eq.s32.totalorder %s24, 1
      %p37 = scmp.ne.s32.totalorder %s32, %s34
      %p38 = scmp.eq.s32.totalorder %s24, 0
      %p39 = por %p37, %p38
      %p40 = scmp.ne.s32.totalorder %s32, %s34
      %p41 = scmp.eq.s32.totalorder %s29, 1
      %p42 = por %p40, %p41
      %p43 = scmp.ne.s32.totalorder %s34, %s35
      %p44 = scmp.eq.s32.totalorder %s29, 0
      %p45 = por %p43, %p44
      %p46 = scmp.ne.s32.totalorder %s34, %s35
      %p47 = scmp.eq.s32.totalorder %s30, 1
      %p48 = por %p46, %p47
      %p50 = scmp.ne.s32.totalorder %s35, %s49
      %p51 = scmp.eq.s32.totalorder %s30, 0
      %p52 = por %p50, %p51
      %s54 = sadd.s32 %s53, 1
      %p57 = scmp.eq.s32.totalorder %s24, 1
      %p58 = scmp.ne.s32.totalorder %s53, %s55
      %p59 = scmp.eq.s32.totalorder %s24, 0
      %p60 = por %p58, %p59
      %p61 = scmp.ne.s32.totalorder %s53, %s55
      %p62 = scmp.eq.s32.totalorder %s29, 1
      %p63 = por %p61, %p62
      %p64 = scmp.ne.s32.totalorder %s55, %s56
      %p65 = scmp.eq.s32.totalorder %s29, 0
      %p66 = por %p64, %p65
      %p67 = scmp.ne.s32.totalorder %s55, %s56
      %p68 = scmp.eq.s32.totalorder %s30, 1
      %p69 = por %p67, %p68
      %p71 = scmp.ne.s32.totalorder %s56, %s70
      %p72 = scmp.eq.s32.totalorder %s30, 0
      %p73 = por %p71, %p72
      %s75 = sadd.s32 %s74, 1
      %p78 = scmp.eq.s32.totalorder %s24, 1
      %p79 = scmp.ne.s32.totalorder %s74, %s76
      %p80 = scmp.eq.s32.totalorder %s24, 0
      %p81 = por %p79, %p80
      %p82 = scmp.ne.s32.totalorder %s74, %s76
      %p83 = scmp.eq.s32.totalorder %s29, 1
      %p84 = por %p82, %p83
      %p85 = scmp.ne.s32.totalorder %s76, %s77
      %p86 = scmp.eq.s32.totalorder %s29, 0
      %p87 = por %p85, %p86
      %p88 = scmp.ne.s32.totalorder %s76, %s77
      %p89 = scmp.eq.s32.totalorder %s30, 1
      %p90 = por %p88, %p89
      %p92 = scmp.ne.s32.totalorder %s77, %s91
      %p93 = scmp.eq.s32.totalorder %s30, 0
      %p94 = por %p92, %p93
      %s96 = sadd.s32 %s95, 1
      %p99 = scmp.eq.s32.totalorder %s24, 1
      %p100 = scmp.ne.s32.totalorder %s95, %s97
      %p101 = scmp.eq.s32.totalorder %s24, 0
      %p102 = por %p100, %p101
      %p103 = scmp.ne.s32.totalorder %s95, %s97
      %p104 = scmp.eq.s32.totalorder %s29, 1
      %p105 = por %p103, %p104
      %p106 = scmp.ne.s32.totalorder %s97, %s98
      %p107 = scmp.eq.s32.totalorder %s29, 0
      %p108 = por %p106, %p107
      %p109 = scmp.ne.s32.totalorder %s97, %s98
      %p110 = scmp.eq.s32.totalorder %s30, 1
      %p111 = por %p109, %p110
      %p113 = scmp.ne.s32.totalorder %s98, %s112
      %p114 = scmp.eq.s32.totalorder %s30, 0
      %p115 = por %p113, %p114
      %s117 = sadd.s32 %s116, 1
      %p120 = scmp.eq.s32.totalorder %s24, 1
      %p121 = scmp.ne.s32.totalorder %s116, %s118
      %p122 = scmp.eq.s32.totalorder %s24, 0
      %p123 = por %p121, %p122
      %p124 = scmp.ne.s32.totalorder %s116, %s118
      %p125 = scmp.eq.s32.totalorder %s29, 1
      %p126 = por %p124, %p125
      %p127 = scmp.ne.s32.totalorder %s118, %s119
      %p128 = scmp.eq.s32.totalorder %s29, 0
      %p129 = por %p127, %p128
      %p130 = scmp.ne.s32.totalorder %s118, %s119
      %p131 = scmp.eq.s32.totalorder %s30, 1
      %p132 = por %p130, %p131
      %p134 = scmp.ne.s32.totalorder %s119, %s133
      %p135 = scmp.eq.s32.totalorder %s30, 0
      %p136 = por %p134, %p135
      %s138 = sadd.s32 %s137, 1
      %p141 = scmp.eq.s32.totalorder %s24, 1
      %p142 = scmp.ne.s32.totalorder %s137, %s139
      %p143 = scmp.eq.s32.totalorder %s24, 0
      %p144 = por %p142, %p143
      %p145 = scmp.ne.s32.totalorder %s137, %s139
      %p146 = scmp.eq.s32.totalorder %s29, 1
      %p147 = por %p145, %p146
      %p148 = scmp.ne.s32.totalorder %s139, %s140
      %p149 = scmp.eq.s32.totalorder %s29, 0
      %p150 = por %p148, %p149
      %p151 = scmp.ne.s32.totalorder %s139, %s140
      %p152 = scmp.eq.s32.totalorder %s30, 1
      %p153 = por %p151, %p152
      %p155 = scmp.ne.s32.totalorder %s140, %s154
      %p156 = scmp.eq.s32.totalorder %s30, 0
      %p157 = por %p155, %p156
      %s159 = sadd.s32 %s158, 1
      %p162 = scmp.eq.s32.totalorder %s24, 1
      %p163 = scmp.ne.s32.totalorder %s158, %s160
      %p164 = scmp.eq.s32.totalorder %s24, 0
      %p165 = por %p163, %p164
      %p166 = scmp.ne.s32.totalorder %s158, %s160
      %p167 = scmp.eq.s32.totalorder %s29, 1
      %p168 = por %p166, %p167
      %p169 = scmp.ne.s32.totalorder %s160, %s161
      %p170 = scmp.eq.s32.totalorder %s29, 0
      %p171 = por %p169, %p170
      %p172 = scmp.ne.s32.totalorder %s160, %s161
      %p173 = scmp.eq.s32.totalorder %s30, 1
      %p174 = por %p172, %p173
      %p176 = scmp.ne.s32.totalorder %s161, %s175
      %p177 = scmp.eq.s32.totalorder %s30, 0
      %p178 = por %p176, %p177
      %s180 = sadd.s32 %s179, 1
      %p183 = scmp.eq.s32.totalorder %s24, 1
      %p184 = scmp.ne.s32.totalorder %s179, %s181
      %p185 = scmp.eq.s32.totalorder %s24, 0
      %p186 = por %p184, %p185
      %p187 = scmp.ne.s32.totalorder %s179, %s181
      %p188 = scmp.eq.s32.totalorder %s29, 1
      %p189 = por %p187, %p188
      %p190 = scmp.ne.s32.totalorder %s181, %s182
      %p191 = scmp.eq.s32.totalorder %s29, 0
      %p192 = por %p190, %p191
      %p193 = scmp.ne.s32.totalorder %s181, %s182
      %p194 = scmp.eq.s32.totalorder %s30, 1
      %p195 = por %p193, %p194
      %p197 = scmp.ne.s32.totalorder %s182, %s196
      %p198 = scmp.eq.s32.totalorder %s30, 0
      %p199 = por %p197, %p198
      %s201 = sadd.s32 %s200, 1
      %p204 = scmp.eq.s32.totalorder %s24, 1
      %p205 = scmp.ne.s32.totalorder %s200, %s202
      %p206 = scmp.eq.s32.totalorder %s24, 0
      %p207 = por %p205, %p206
      %p208 = scmp.ne.s32.totalorder %s200, %s202
      %p209 = scmp.eq.s32.totalorder %s29, 1
      %p210 = por %p208, %p209
      %p211 = scmp.ne.s32.totalorder %s202, %s203
      %p212 = scmp.eq.s32.totalorder %s29, 0
      %p213 = por %p211, %p212
      %p214 = scmp.ne.s32.totalorder %s202, %s203
      %p215 = scmp.eq.s32.totalorder %s30, 1
      %p216 = por %p214, %p215
      %p218 = scmp.ne.s32.totalorder %s203, %s217
      %p219 = scmp.eq.s32.totalorder %s30, 0
      %p220 = por %p218, %p219
      %s221 = ssub.s32 %s24, %s31
      %p222 = scmp.eq.s32.totalorder %s221, 0
      %s224 = sadd.s32 %s223, 1
      %s225 = scalar_select %p222, %s223, %s224
      %p228 = pneg %p222
      %p229 = scmp.eq.s32.totalorder %s24, 1
      %p230 = por %p228, %p229
      %p231 = scmp.ne.s32.totalorder %s223, %s226
      %p232 = scmp.eq.s32.totalorder %s24, 0
      %p233 = por %p231, %p232
      %p234 = scmp.ne.s32.totalorder %s223, %s226
      %p235 = scmp.eq.s32.totalorder %s29, 1
      %p236 = por %p234, %p235
      %p237 = scmp.ne.s32.totalorder %s226, %s227
      %p238 = scmp.eq.s32.totalorder %s29, 0
      %p239 = por %p237, %p238
      %p240 = scmp.ne.s32.totalorder %s226, %s227
      %p241 = scmp.eq.s32.totalorder %s30, 1
      %p242 = por %p240, %p241
      %p244 = scmp.ne.s32.totalorder %s227, %s243
      %p245 = scmp.eq.s32.totalorder %s30, 0
      %p246 = por %p244, %p245
      %s247 = ssub.s32 %s24, %s31
      %p248 = scmp.eq.s32.totalorder %s247, 0
      %s250 = sadd.s32 %s249, 1
      %s251 = scalar_select %p248, %s249, %s250
      %p254 = pneg %p248
      %p255 = scmp.eq.s32.totalorder %s24, 1
      %p256 = por %p254, %p255
      %p257 = scmp.ne.s32.totalorder %s249, %s252
      %p258 = scmp.eq.s32.totalorder %s24, 0
      %p259 = por %p257, %p258
      %p260 = scmp.ne.s32.totalorder %s249, %s252
      %p261 = scmp.eq.s32.totalorder %s29, 1
      %p262 = por %p260, %p261
      %p263 = scmp.ne.s32.totalorder %s252, %s253
      %p264 = scmp.eq.s32.totalorder %s29, 0
      %p265 = por %p263, %p264
      %p266 = scmp.ne.s32.totalorder %s252, %s253
      %p267 = scmp.eq.s32.totalorder %s30, 1
      %p268 = por %p266, %p267
      %p270 = scmp.ne.s32.totalorder %s253, %s269
      %p271 = scmp.eq.s32.totalorder %s30, 0
      %p272 = por %p270, %p271
      %p273 = scmp.le.s32.totalorder 1, %s24
      %p274 = scmp.lt.s32.totalorder %s24, 3
      %p275 = pnand %p273, %p274
      %p276 = pneg %p275
      // Predicated region
      $region9: #{tpu_custom_call.1} parent=5 // pred_check
        _
      $region10: #{tpu_custom_call.1} parent=5 // pred_check_branch
        %278 = sbr.rel (%p275) target = $region12
      $region11: #{tpu_custom_call.1} parent=5 // pred_region
        %s279 = ssub.s32 %s24, 1
        // Predicated region
        $region13: #{tpu_custom_call.1} parent=11 // pred_check
          %p280 = pneg %p45
        $region14: #{tpu_custom_call.1} parent=11 // pred_check_branch
          %282 = sbr.rel (%p280) target = $region16
        $region15: #{tpu_custom_call.1} parent=11 // pred_region
          _
        $region16: #{tpu_custom_call.1} parent=11 // pred_fallthru
          _
        // Predicated region
        $region17: #{tpu_custom_call.1} parent=11 // pred_check
          %p283 = pneg %p66
        $region18: #{tpu_custom_call.1} parent=11 // pred_check_branch
          %285 = sbr.rel (%p283) target = $region20
        $region19: #{tpu_custom_call.1} parent=11 // pred_region
          _
        $region20: #{tpu_custom_call.1} parent=11 // pred_fallthru
          _
        // Predicated region
        $region21: #{tpu_custom_call.1} parent=11 // pred_check
          %p286 = pneg %p87
        $region22: #{tpu_custom_call.1} parent=11 // pred_check_branch
          %288 = sbr.rel (%p286) target = $region24
        $region23: #{tpu_custom_call.1} parent=11 // pred_region
          _
        $region24: #{tpu_custom_call.1} parent=11 // pred_fallthru
          _
        // Predicated region
        $region25: #{tpu_custom_call.1} parent=11 // pred_check
          %p289 = pneg %p108
        $region26: #{tpu_custom_call.1} parent=11 // pred_check_branch
          %291 = sbr.rel (%p289) target = $region28
        $region27: #{tpu_custom_call.1} parent=11 // pred_region
          _
        $region28: #{tpu_custom_call.1} parent=11 // pred_fallthru
          _
        // Predicated region
        $region29: #{tpu_custom_call.1} parent=11 // pred_check
          %p292 = pneg %p129
        $region30: #{tpu_custom_call.1} parent=11 // pred_check_branch
          %294 = sbr.rel (%p292) target = $region32
        $region31: #{tpu_custom_call.1} parent=11 // pred_region
          _
        $region32: #{tpu_custom_call.1} parent=11 // pred_fallthru
          _
        // Predicated region
        $region33: #{tpu_custom_call.1} parent=11 // pred_check
          %p295 = pneg %p150
        $region34: #{tpu_custom_call.1} parent=11 // pred_check_branch
          %297 = sbr.rel (%p295) target = $region36
        $region35: #{tpu_custom_call.1} parent=11 // pred_region
          _
        $region36: #{tpu_custom_call.1} parent=11 // pred_fallthru
          _
        // Predicated region
        $region37: #{tpu_custom_call.1} parent=11 // pred_check
          %p298 = pneg %p171
        $region38: #{tpu_custom_call.1} parent=11 // pred_check_branch
          %300 = sbr.rel (%p298) target = $region40
        $region39: #{tpu_custom_call.1} parent=11 // pred_region
          _
        $region40: #{tpu_custom_call.1} parent=11 // pred_fallthru
          _
        // Predicated region
        $region41: #{tpu_custom_call.1} parent=11 // pred_check
          %p301 = pneg %p192
        $region42: #{tpu_custom_call.1} parent=11 // pred_check_branch
          %303 = sbr.rel (%p301) target = $region44
        $region43: #{tpu_custom_call.1} parent=11 // pred_region
          _
        $region44: #{tpu_custom_call.1} parent=11 // pred_fallthru
          _
        // Predicated region
        $region45: #{tpu_custom_call.1} parent=11 // pred_check
          %p304 = pneg %p213
        $region46: #{tpu_custom_call.1} parent=11 // pred_check_branch
          %306 = sbr.rel (%p304) target = $region48
        $region47: #{tpu_custom_call.1} parent=11 // pred_region
          _
        $region48: #{tpu_custom_call.1} parent=11 // pred_fallthru
          _
      $region12: #{tpu_custom_call.1} parent=5 // pred_fallthru
        _
      %p307 = scmp.lt.s32.totalorder %s24, 2
      // Predicated region
      $region49: #{tpu_custom_call.1} parent=5 // pred_check
        %p308 = pneg %p307
      $region50: #{tpu_custom_call.1} parent=5 // pred_check_branch
        %310 = sbr.rel (%p308) target = $region52
      $region51: #{tpu_custom_call.1} parent=5 // pred_region
        // Predicated region
        $region53: #{tpu_custom_call.1} parent=51 // pred_check
          %p311 = pneg %p233
        $region54: #{tpu_custom_call.1} parent=51 // pred_check_branch
          %313 = sbr.rel (%p311) target = $region56
        $region55: #{tpu_custom_call.1} parent=51 // pred_region
          %s314 = sand.u32 %s223, 1
          %s315 = scalar_lea.sflag [#allocation4], %s314
          %s316 = sand.u32 %s223, 1
          %s317 = smul.addr %s316, 64
          %s318 = scalar_lea.vmem [#allocation3], %s317
          %s320 = ssub.s32 1024, 1024
          %321 = vsyncadd %s315, %s320
          %s322 = smul.addr %s24, 8
          %s323 = smul.addr %s322, 128
          %s324 = scalar_lea.hbm %s9, %s323
          %s325 = sshll.u32 %s318, 4
          %s326 = int_to_ptr.vmem [resolvable:$true] %s325
          %331 = dma.hbm_to_vmem [thread:$0]  %s324, 1024, %s326, %s315, 256, 256, 16
        $region56: #{tpu_custom_call.1} parent=51 // pred_fallthru
          _
      $region52: #{tpu_custom_call.1} parent=5 // pred_fallthru
        _
      %p332 = scmp.le.s32.totalorder 1, %s24
      %p333 = scmp.lt.s32.totalorder %s24, 3
      %p334 = pnand %p332, %p333
      %p335 = pneg %p334
      // Predicated region
      $region57: #{tpu_custom_call.1} parent=5 // pred_check
        _
      $region58: #{tpu_custom_call.1} parent=5 // pred_check_branch
        %337 = sbr.rel (%p334) target = $region60
      $region59: #{tpu_custom_call.1} parent=5 // pred_region
        %s338 = ssub.s32 %s24, 1
        %s339 = sand.u32 %s226, 1
        %s340 = scalar_lea.sflag [#allocation4], %s339
        %s341 = sand.u32 %s226, 1
        %s342 = smul.addr %s341, 64
        %s343 = scalar_lea.vmem [#allocation3], %s342
        // Predicated region
        $region61: #{tpu_custom_call.1} parent=59 // pred_check
          %p344 = pneg %p239
        $region62: #{tpu_custom_call.1} parent=59 // pred_check_branch
          %346 = sbr.rel (%p344) target = $region64
        $region63: #{tpu_custom_call.1} parent=59 // pred_region
          %347 = dma.done %s340, 1024
        $region64: #{tpu_custom_call.1} parent=59 // pred_fallthru
          _
        %p348 = pneg %p45
        %p349 = pneg %p42
        %p350 = pneg %p66
        %p351 = pneg %p63
        %p352 = pneg %p87
        %p353 = pneg %p84
        %p354 = pneg %p108
        %p355 = pneg %p105
        %p356 = pneg %p129
        %p357 = pneg %p126
        %p358 = pneg %p150
        %p359 = pneg %p147
        %p360 = pneg %p171
        %p361 = pneg %p168
        %p362 = pneg %p192
        %p363 = pneg %p189
        %p364 = pneg %p213
        %p365 = pneg %p210
        %s366 = sand.u32 %s226, 1
        %s367 = scalar_lea.sflag [#allocation4], %s366
        %s368 = sand.u32 %s226, 1
        %s369 = smul.addr %s368, 64
        %s370 = scalar_lea.vmem [#allocation3], %s369
        %p371 = pneg %p239
        %p372 = pneg %p236
        %p373 = pneg %p265
        %p374 = pneg %p262
        %s375 = sand.u32 %s252, 1
        %s376 = scalar_lea.sflag [#allocation5], %s375
        %s377 = sand.u32 %s252, 1
        %s378 = smul.addr %s377, 2
        %s379 = scalar_lea.vmem [#allocation6], %s378
        %v380 = vld [vmem:[%s1] sm:$0x3]
        %v381 = vld [vmem:[%s2] sm:$0x3]
        %v382 = vld [vmem:[%s3] sm:$0x3]
        %v383 = vld [vmem:[%s4] sm:$0x3]
        %v384 = vld [vmem:[%s5] sm:$0x3]
        %v385 = vld [vmem:[%s6] sm:$0x3]
        %v386 = vld [vmem:[%s7] sm:$0x1]
        %v387 = vld [vmem:[#allocation2] sm:$0x1]
        %v388 = vld [vmem:[%s0] sm:$0xf]
        %v389 = vadd.s32 %v388, 4294967292
        %vm390 = vcmp.ge.s32.totalorder %v389, 0
        %vm391 = vcmp.lt.s32.totalorder %v389, 16
        %vm392 = vmand %vm390, %vm391
        %v393 = vsel %vm390, 1, 0
        %v394 = vrot.slane %v393, 7
        %v395 = vrot.slane %v394, 2
        %vm396 = vcmp.ne.s32.totalorder %v395, 0
        %vm397 = vmand %vm392, %vm396
        %v398 = vsel %vm391, 1, 0
        %v399 = vrot.slane %v398, 7
        %v400 = vrot.slane %v399, 2
        %vm401 = vcmp.ne.s32.totalorder %v400, 0
        %vm402 = vmand %vm397, %vm401
        %v403 = vsel %vm402, 1, 0
        %v404 = vcvt.s32.f32 %v403
        %vm405 = vcmp.ge.s32.totalorder %v388, 0
        %v406 = vsel %vm405, 1, 0
        %v407 = vrot.slane %v406, 7
        %v408 = vrot.slane %v407, 2
        %vm409 = vcmp.ne.s32.totalorder %v408, 0
        %vm410 = vmand %vm392, %vm409
        %vm411 = vcmp.lt.s32.totalorder %v388, 16
        %v412 = vsel %vm411, 1, 0
        %v413 = vrot.slane %v412, 7
        %v414 = vrot.slane %v413, 2
        %vm415 = vcmp.ne.s32.totalorder %v414, 0
        %vm416 = vmand %vm410, %vm415
        %v417 = vsel %vm416, 1, 0
        %v418 = vcvt.s32.f32 %v417
        %v419 = vadd.s32 %v388, 4
        %vm420 = vcmp.ge.s32.totalorder %v419, 0
        %v421 = vsel %vm420, 1, 0
        %v422 = vrot.slane %v421, 7
        %v423 = vrot.slane %v422, 2
        %vm424 = vcmp.ne.s32.totalorder %v423, 0
        %vm425 = vmand %vm392, %vm424
        %vm426 = vcmp.lt.s32.totalorder %v419, 16
        %v427 = vsel %vm426, 1, 0
        %v428 = vrot.slane %v427, 7
        %v429 = vrot.slane %v428, 2
        %vm430 = vcmp.ne.s32.totalorder %v429, 0
        %vm431 = vmand %vm425, %vm430
        %v432 = vsel %vm431, 1, 0
        %v433 = vcvt.s32.f32 %v432
        %vm434 = vmand %vm405, %vm411
        %vm435 = vmand %vm434, %vm396
        %vm436 = vmand %vm435, %vm401
        %v437 = vsel %vm436, 1, 0
        %v438 = vcvt.s32.f32 %v437
        %vm439 = vmand %vm434, %vm424
        %vm440 = vmand %vm439, %vm430
        %v441 = vsel %vm440, 1, 0
        %v442 = vcvt.s32.f32 %v441
        %vm443 = vmand %vm420, %vm426
        %vm444 = vmand %vm443, %vm396
        %vm445 = vmand %vm444, %vm401
        %v446 = vsel %vm445, 1, 0
        %v447 = vcvt.s32.f32 %v446
        %vm448 = vmand %vm443, %vm409
        %vm449 = vmand %vm448, %vm415
        %v450 = vsel %vm449, 1, 0
        %v451 = vcvt.s32.f32 %v450
        %vm452 = vmand %vm443, %vm424
        %vm453 = vmand %vm452, %vm430
        %v454 = vsel %vm453, 1, 0
        %v455 = vcvt.s32.f32 %v454
        %v456 = vld [vmem:[%s343] sm:$0xff]
        %v457 = vld [vmem:[%s343 + $0x8] sm:$0xff]
        %v458 = vld [vmem:[%s343 + $0x10] sm:$0xff]
        %v459 = vld [vmem:[%s343 + $0x18] sm:$0xff]
        %v460 = vld [vmem:[%s343 + $0x20] sm:$0xff]
        %v461 = vld [vmem:[%s343 + $0x28] sm:$0xff]
        %v462 = vld [vmem:[%s343 + $0x30] sm:$0xff]
        %v463 = vld [vmem:[%s343 + $0x38] sm:$0xff]
        %465 = vset.pattern.permute.xlu0 0
        %466 = vperm.xlu0 %465, %v381
        %v467 = vpop.permute.xlu0 %466
        %vm469 = vcmask 261120
        %v471 = vsel %vm469, %v380, 0
        %473 = vmatprep.subr.mxu0 %v457
        %474 = vmatpush1.msra.mxu0 %v456
        %475 = vmatprep.subr.mxu0 %v459
        %476 = vmatpush1.msra.mxu0 %v458
        %477 = vmatprep.subr.mxu0 %v461
        %478 = vmatpush1.msra.mxu0 %v460
        %479 = vmatprep.subr.mxu0 %v463
        %480 = vmatpush1.msra.mxu0 %v462
        %481 = vmatprep.subr.mxu0 0.0
        %482 = vmatpush1.msra.mxu0 0.0
        %483 = vmatprep.subr.mxu0 0.0
        %484 = vmatpush1.msra.mxu0 0.0
        %485 = vmatprep.subr.mxu0 0.0
        %486 = vmatpush1.msra.mxu0 0.0
        %487 = vmatprep.subr.mxu0 0.0
        %488 = vmatpush1.msra.mxu0 0.0
        %489 = vmatprep.subr.mxu0 0.0
        %490 = vmatpush1.msra.mxu0 0.0
        %491 = vmatprep.subr.mxu0 0.0
        %492 = vmatpush1.msra.mxu0 0.0
        %493 = vmatprep.subr.mxu0 0.0
        %494 = vmatpush1.msra.mxu0 0.0
        %495 = vmatprep.subr.mxu0 0.0
        %496 = vmatpush1.msra.mxu0 0.0
        %497 = vmatprep.subr.mxu0 0.0
        %498 = vmatpush1.msra.mxu0 0.0
        %499 = vmatprep.subr.mxu0 0.0
        %500 = vmatpush1.msra.mxu0 0.0
        %501 = vmatprep.subr.mxu0 0.0
        %502 = vmatpush1.msra.mxu0 0.0
        %503 = vmatprep.subr.mxu0 0.0
        %504 = vmatpush1.msra.mxu0 0.0
        %505 = vmatprep.subr.mxu0 0.0
        %506 = vmatpush1.msra.mxu0 0.0
        %507 = vmatprep.subr.mxu0 0.0
        %508 = vmatpush1.msra.mxu0 0.0
        %509 = vmatprep.subr.mxu0 0.0
        %510 = vmatpush1.msra.mxu0 0.0
        %511 = vmatprep.subr.mxu0 0.0
        %512 = vmatpush1.msra.mxu0 0.0
        %513 = vmatprep.subr.mxu0 0.0
        %514 = vmatpush1.msra.mxu0 0.0
        %515 = vmatprep.subr.mxu0 0.0
        %516 = vmatpush1.msra.mxu0 0.0
        %517 = vmatprep.subr.mxu0 0.0
        %518 = vmatpush1.msra.mxu0 0.0
        %519 = vmatprep.subr.mxu0 0.0
        %520 = vmatpush1.msra.mxu0 0.0
        %521 = vmatprep.subr.mxu0 0.0
        %522 = vmatpush1.msra.mxu0 0.0
        %523 = vmatprep.subr.mxu0 0.0
        %524 = vmatpush1.msra.mxu0 0.0
        %525 = vmatprep.subr.mxu0 0.0
        %526 = vmatpush1.msra.mxu0 0.0
        %527 = vmatprep.subr.mxu0 0.0
        %528 = vmatpush1.msra.mxu0 0.0
        %529 = vmatprep.subr.mxu0 0.0
        %530 = vmatpush1.msra.mxu0 0.0
        %531 = vmatprep.subr.mxu0 0.0
        %532 = vmatpush1.msra.mxu0 0.0
        %533 = vmatprep.subr.mxu0 0.0
        %534 = vmatpush1.msra.mxu0 0.0
        %535 = vmatprep.subr.mxu0 0.0
        %536 = vmatpush1.msra.mxu0 0.0
        %537 = vmatprep.mubr.f32.mxu0 0.0
        %538 = vmatmul.mubr.f32.gmra.mrb[0].mxu0 %v471
        %v539 = vpop.f32.mrb[0].mxu0
        %v540 = vadd.f32 %v467, %v539
        %v541 = vpop.f32.mrb[0].mxu0
        %v542 = vadd.f32 %v467, %v541
        %543 = vdwg.mxu0
        %v544 = vmax.f32 %v540, 0.0
        %v545 = vmax.f32 %v542, 0.0
        %546 = vrot.lane.b32.xlu0 %v544, 68
        %v547 = vpop.permute.xlu0 %546
        %548 = vrot.lane.b32.xlu0 %v545, 68
        %v549 = vpop.permute.xlu0 %548
        %v550 = vlaneseq
        %v551 = vand.u32 %v550, 127
        %vm552 = vcmp.lt.s32.totalorder %v551, 68
        %v553 = vsel %vm552, %v547, %v549
        %v554 = vsel %vm552, %v549, %v547
        %v556 = vlaneseq
        %v557 = vshrl.u32 %v556, 7
        %v558 = vsub.s32 0, %v557
        %v559 = vrot.slane %v404, %v558
        %v560 = vlaneseq
        %v561 = vshrl.u32 %v560, 7
        %v562 = vsub.s32 2, %v561
        %v563 = vrot.slane %v404, %v562
        %v566 = vlaneseq
        %v567 = vshrl.u32 %v566, 7
        %v568 = vsub.s32 0, %v567
        %v569 = vrot.slane %v559, %v568
        %v570 = vlaneseq
        %v571 = vshrl.u32 %v570, 7
        %v572 = vsub.s32 0, %v571
        %v573 = vrot.slane %v563, %v572
        %v574 = vmul.f32 %v554, %v569
        %v575 = vmul.f32 %v553, %v573
        %576 = vrot.lane.b32.xlu0 %v544, 64
        %v577 = vpop.permute.xlu0 %576
        %578 = vrot.lane.b32.xlu0 %v545, 64
        %v579 = vpop.permute.xlu0 %578
        %vm580 = vcmp.lt.s32.totalorder %v551, 64
        %v581 = vsel %vm580, %v577, %v579
        %v582 = vsel %vm580, %v579, %v577
        %v584 = vlaneseq
        %v585 = vshrl.u32 %v584, 7
        %v586 = vsub.s32 0, %v585
        %v587 = vrot.slane %v418, %v586
        %v588 = vlaneseq
        %v589 = vshrl.u32 %v588, 7
        %v590 = vsub.s32 2, %v589
        %v591 = vrot.slane %v418, %v590
        %v594 = vlaneseq
        %v595 = vshrl.u32 %v594, 7
        %v596 = vsub.s32 0, %v595
        %v597 = vrot.slane %v587, %v596
        %v598 = vlaneseq
        %v599 = vshrl.u32 %v598, 7
        %v600 = vsub.s32 0, %v599
        %v601 = vrot.slane %v591, %v600
        %v602 = vmul.f32 %v582, %v597
        %v603 = vmul.f32 %v581, %v601
        %604 = vrot.lane.b32.xlu0 %v544, 60
        %v605 = vpop.permute.xlu0 %604
        %606 = vrot.lane.b32.xlu0 %v545, 60
        %v607 = vpop.permute.xlu0 %606
        %vm608 = vcmp.lt.s32.totalorder %v551, 60
        %v609 = vsel %vm608, %v605, %v607
        %v610 = vsel %vm608, %v607, %v605
        %v612 = vlaneseq
        %v613 = vshrl.u32 %v612, 7
        %v614 = vsub.s32 0, %v613
        %v615 = vrot.slane %v433, %v614
        %v616 = vlaneseq
        %v617 = vshrl.u32 %v616, 7
        %v618 = vsub.s32 2, %v617
        %v619 = vrot.slane %v433, %v618
        %v622 = vlaneseq
        %v623 = vshrl.u32 %v622, 7
        %v624 = vsub.s32 0, %v623
        %v625 = vrot.slane %v615, %v624
        %v626 = vlaneseq
        %v627 = vshrl.u32 %v626, 7
        %v628 = vsub.s32 0, %v627
        %v629 = vrot.slane %v619, %v628
        %v630 = vmul.f32 %v610, %v625
        %v631 = vmul.f32 %v609, %v629
        %632 = vrot.lane.b32.xlu0 %v544, 4
        %v633 = vpop.permute.xlu0 %632
        %634 = vrot.lane.b32.xlu0 %v545, 4
        %v635 = vpop.permute.xlu0 %634
        %vm636 = vcmp.lt.s32.totalorder %v551, 4
        %v637 = vsel %vm636, %v633, %v635
        %v638 = vsel %vm636, %v635, %v633
        %v640 = vlaneseq
        %v641 = vshrl.u32 %v640, 7
        %v642 = vsub.s32 0, %v641
        %v643 = vrot.slane %v438, %v642
        %v644 = vlaneseq
        %v645 = vshrl.u32 %v644, 7
        %v646 = vsub.s32 2, %v645
        %v647 = vrot.slane %v438, %v646
        %v650 = vlaneseq
        %v651 = vshrl.u32 %v650, 7
        %v652 = vsub.s32 0, %v651
        %v653 = vrot.slane %v643, %v652
        %v654 = vlaneseq
        %v655 = vshrl.u32 %v654, 7
        %v656 = vsub.s32 0, %v655
        %v657 = vrot.slane %v647, %v656
        %v658 = vmul.f32 %v638, %v653
        %v659 = vmul.f32 %v637, %v657
        %660 = vrot.lane.b32.xlu0 %v544, 124
        %v661 = vpop.permute.xlu0 %660
        %662 = vrot.lane.b32.xlu0 %v545, 124
        %v663 = vpop.permute.xlu0 %662
        %vm664 = vcmp.lt.s32.totalorder %v551, 124
        %v665 = vsel %vm664, %v661, %v663
        %v666 = vsel %vm664, %v663, %v661
        %v668 = vlaneseq
        %v669 = vshrl.u32 %v668, 7
        %v670 = vsub.s32 0, %v669
        %v671 = vrot.slane %v442, %v670
        %v672 = vlaneseq
        %v673 = vshrl.u32 %v672, 7
        %v674 = vsub.s32 2, %v673
        %v675 = vrot.slane %v442, %v674
        %v678 = vlaneseq
        %v679 = vshrl.u32 %v678, 7
        %v680 = vsub.s32 0, %v679
        %v681 = vrot.slane %v671, %v680
        %v682 = vlaneseq
        %v683 = vshrl.u32 %v682, 7
        %v684 = vsub.s32 0, %v683
        %v685 = vrot.slane %v675, %v684
        %v686 = vmul.f32 %v665, %v681
        %v687 = vmul.f32 %v666, %v685
        %v689 = vlaneseq
        %v690 = vshrl.u32 %v689, 7
        %v691 = vsub.s32 0, %v690
        %v692 = vrot.slane %v447, %v691
        %v693 = vlaneseq
        %v694 = vshrl.u32 %v693, 7
        %v695 = vsub.s32 2, %v694
        %v696 = vrot.slane %v447, %v695
        %v699 = vlaneseq
        %v700 = vshrl.u32 %v699, 7
        %v701 = vsub.s32 0, %v700
        %v702 = vrot.slane %v692, %v701
        %v703 = vlaneseq
        %v704 = vshrl.u32 %v703, 7
        %v705 = vsub.s32 0, %v704
        %v706 = vrot.slane %v696, %v705
        %v707 = vmul.f32 %v553, %v702
        %v708 = vmul.f32 %v554, %v706
        %v710 = vlaneseq
        %v711 = vshrl.u32 %v710, 7
        %v712 = vsub.s32 0, %v711
        %v713 = vrot.slane %v451, %v712
        %v714 = vlaneseq
        %v715 = vshrl.u32 %v714, 7
        %v716 = vsub.s32 2, %v715
        %v717 = vrot.slane %v451, %v716
        %v720 = vlaneseq
        %v721 = vshrl.u32 %v720, 7
        %v722 = vsub.s32 0, %v721
        %v723 = vrot.slane %v713, %v722
        %v724 = vlaneseq
        %v725 = vshrl.u32 %v724, 7
        %v726 = vsub.s32 0, %v725
        %v727 = vrot.slane %v717, %v726
        %v728 = vmul.f32 %v581, %v723
        %v729 = vmul.f32 %v582, %v727
        %v731 = vlaneseq
        %v732 = vshrl.u32 %v731, 7
        %v733 = vsub.s32 0, %v732
        %v734 = vrot.slane %v455, %v733
        %v735 = vlaneseq
        %v736 = vshrl.u32 %v735, 7
        %v737 = vsub.s32 2, %v736
        %v738 = vrot.slane %v455, %v737
        %v741 = vlaneseq
        %v742 = vshrl.u32 %v741, 7
        %v743 = vsub.s32 0, %v742
        %v744 = vrot.slane %v734, %v743
        %v745 = vlaneseq
        %v746 = vshrl.u32 %v745, 7
        %v747 = vsub.s32 0, %v746
        %v748 = vrot.slane %v738, %v747
        %v749 = vmul.f32 %v609, %v744
        %v750 = vmul.f32 %v610, %v748
        %v753 = vrot.slane %v602, 6
        %v754 = vrot.slane %v603, 6
        %v759 = vrot.slane %v630, 4
        %v760 = vrot.slane %v631, 4
        %v765 = vrot.slane %v658, 2
        %v766 = vrot.slane %v659, 2
        %v771 = vrot.slane %v686, 6
        %v772 = vrot.slane %v687, 6
        %v777 = vrot.slane %v707, 4
        %v778 = vrot.slane %v708, 4
        %v783 = vrot.slane %v728, 2
        %v784 = vrot.slane %v729, 2
        %vm787 = vcmask 1041408
        %v788 = vsel %vm787, %v574, %v753
        %v789 = vsel %vm787, %v575, %v754
        %vm790 = vcmask 1043456
        %v791 = vsel %vm790, %v788, %v759
        %v792 = vsel %vm790, %v789, %v760
        %vm793 = vcmask 1045504
        %v794 = vsel %vm793, %v791, %v765
        %v795 = vsel %vm793, %v792, %v766
        %v796 = vsel %vm787, %v544, %v771
        %v797 = vsel %vm787, %v545, %v772
        %v798 = vsel %vm790, %v796, %v777
        %v799 = vsel %vm790, %v797, %v778
        %v800 = vsel %vm793, %v798, %v783
        %v801 = vsel %vm793, %v799, %v784
        %803 = vset.pattern.permute.xlu0 0
        %804 = vperm.xlu0 %803, %v383
        %v805 = vpop.permute.xlu0 %804
        %vm807 = vcmask 146432
        %v809 = vsel %vm807, %v382, 0
        %v812 = vsel %vm787, %v749, 0
        %v815 = vsel %vm787, %v750, 0
        %817 = vmatprep.subr.mxu0 %v795
        %818 = vmatpush1.msra.mxu0 %v794
        %819 = vmatprep.subr.mxu0 %v801
        %820 = vmatpush1.msra.mxu0 %v800
        %821 = vmatprep.subr.mxu0 %v815
        %822 = vmatpush1.msra.mxu0 %v812
        %823 = vmatprep.subr.mxu0 0.0
        %824 = vmatpush1.msra.mxu0 0.0
        %825 = vmatprep.subr.mxu0 0.0
        %826 = vmatpush1.msra.mxu0 0.0
        %827 = vmatprep.subr.mxu0 0.0
        %828 = vmatpush1.msra.mxu0 0.0
        %829 = vmatprep.subr.mxu0 0.0
        %830 = vmatpush1.msra.mxu0 0.0
        %831 = vmatprep.subr.mxu0 0.0
        %832 = vmatpush1.msra.mxu0 0.0
        %833 = vmatprep.subr.mxu0 0.0
        %834 = vmatpush1.msra.mxu0 0.0
        %835 = vmatprep.subr.mxu0 0.0
        %836 = vmatpush1.msra.mxu0 0.0
        %837 = vmatprep.subr.mxu0 0.0
        %838 = vmatpush1.msra.mxu0 0.0
        %839 = vmatprep.subr.mxu0 0.0
        %840 = vmatpush1.msra.mxu0 0.0
        %841 = vmatprep.subr.mxu0 0.0
        %842 = vmatpush1.msra.mxu0 0.0
        %843 = vmatprep.subr.mxu0 0.0
        %844 = vmatpush1.msra.mxu0 0.0
        %845 = vmatprep.subr.mxu0 0.0
        %846 = vmatpush1.msra.mxu0 0.0
        %847 = vmatprep.subr.mxu0 0.0
        %848 = vmatpush1.msra.mxu0 0.0
        %849 = vmatprep.subr.mxu0 0.0
        %850 = vmatpush1.msra.mxu0 0.0
        %851 = vmatprep.subr.mxu0 0.0
        %852 = vmatpush1.msra.mxu0 0.0
        %853 = vmatprep.subr.mxu0 0.0
        %854 = vmatpush1.msra.mxu0 0.0
        %855 = vmatprep.subr.mxu0 0.0
        %856 = vmatpush1.msra.mxu0 0.0
        %857 = vmatprep.subr.mxu0 0.0
        %858 = vmatpush1.msra.mxu0 0.0
        %859 = vmatprep.subr.mxu0 0.0
        %860 = vmatpush1.msra.mxu0 0.0
        %861 = vmatprep.subr.mxu0 0.0
        %862 = vmatpush1.msra.mxu0 0.0
        %863 = vmatprep.subr.mxu0 0.0
        %864 = vmatpush1.msra.mxu0 0.0
        %865 = vmatprep.subr.mxu0 0.0
        %866 = vmatpush1.msra.mxu0 0.0
        %867 = vmatprep.subr.mxu0 0.0
        %868 = vmatpush1.msra.mxu0 0.0
        %869 = vmatprep.subr.mxu0 0.0
        %870 = vmatpush1.msra.mxu0 0.0
        %871 = vmatprep.subr.mxu0 0.0
        %872 = vmatpush1.msra.mxu0 0.0
        %873 = vmatprep.subr.mxu0 0.0
        %874 = vmatpush1.msra.mxu0 0.0
        %875 = vmatprep.subr.mxu0 0.0
        %876 = vmatpush1.msra.mxu0 0.0
        %877 = vmatprep.subr.mxu0 0.0
        %878 = vmatpush1.msra.mxu0 0.0
        %879 = vmatprep.subr.mxu0 0.0
        %880 = vmatpush1.msra.mxu0 0.0
        %881 = vmatprep.mubr.f32.mxu0 0.0
        %882 = vmatmul.mubr.f32.gmra.mrb[0].mxu0 %v809
        %v883 = vpop.f32.mrb[0].mxu0
        %v884 = vadd.f32 %v805, %v883
        %v885 = vpop.f32.mrb[0].mxu0
        %v886 = vadd.f32 %v805, %v885
        %887 = vdwg.mxu0
        %v888 = vmax.f32 %v884, 0.0
        %v889 = vmax.f32 %v886, 0.0
        %890 = vrot.lane.b32.xlu0 %v888, 68
        %v891 = vpop.permute.xlu0 %890
        %892 = vrot.lane.b32.xlu0 %v889, 68
        %v893 = vpop.permute.xlu0 %892
        %v894 = vsel %vm552, %v891, %v893
        %v895 = vsel %vm552, %v893, %v891
        %v896 = vmul.f32 %v895, %v569
        %v897 = vmul.f32 %v894, %v573
        %898 = vrot.lane.b32.xlu0 %v888, 64
        %v899 = vpop.permute.xlu0 %898
        %900 = vrot.lane.b32.xlu0 %v889, 64
        %v901 = vpop.permute.xlu0 %900
        %v902 = vsel %vm580, %v899, %v901
        %v903 = vsel %vm580, %v901, %v899
        %v904 = vmul.f32 %v903, %v597
        %v905 = vmul.f32 %v902, %v601
        %906 = vrot.lane.b32.xlu0 %v888, 60
        %v907 = vpop.permute.xlu0 %906
        %908 = vrot.lane.b32.xlu0 %v889, 60
        %v909 = vpop.permute.xlu0 %908
        %v910 = vsel %vm608, %v907, %v909
        %v911 = vsel %vm608, %v909, %v907
        %v912 = vmul.f32 %v911, %v625
        %v913 = vmul.f32 %v910, %v629
        %914 = vrot.lane.b32.xlu0 %v888, 4
        %v915 = vpop.permute.xlu0 %914
        %916 = vrot.lane.b32.xlu0 %v889, 4
        %v917 = vpop.permute.xlu0 %916
        %v918 = vsel %vm636, %v915, %v917
        %v919 = vsel %vm636, %v917, %v915
        %v920 = vmul.f32 %v919, %v653
        %v921 = vmul.f32 %v918, %v657
        %922 = vrot.lane.b32.xlu0 %v888, 124
        %v923 = vpop.permute.xlu0 %922
        %924 = vrot.lane.b32.xlu0 %v889, 124
        %v925 = vpop.permute.xlu0 %924
        %v926 = vsel %vm664, %v923, %v925
        %v927 = vsel %vm664, %v925, %v923
        %v928 = vmul.f32 %v926, %v681
        %v929 = vmul.f32 %v927, %v685
        %v930 = vmul.f32 %v894, %v702
        %v931 = vmul.f32 %v895, %v706
        %v932 = vmul.f32 %v902, %v723
        %v933 = vmul.f32 %v903, %v727
        %v934 = vmul.f32 %v910, %v744
        %v935 = vmul.f32 %v911, %v748
        %v938 = vrot.slane %v904, 6
        %v939 = vrot.slane %v905, 6
        %v944 = vrot.slane %v912, 4
        %v945 = vrot.slane %v913, 4
        %v950 = vrot.slane %v920, 2
        %v951 = vrot.slane %v921, 2
        %v956 = vrot.slane %v928, 6
        %v957 = vrot.slane %v929, 6
        %v962 = vrot.slane %v930, 4
        %v963 = vrot.slane %v931, 4
        %v968 = vrot.slane %v932, 2
        %v969 = vrot.slane %v933, 2
        %v972 = vsel %vm787, %v896, %v938
        %v973 = vsel %vm787, %v897, %v939
        %v974 = vsel %vm790, %v972, %v944
        %v975 = vsel %vm790, %v973, %v945
        %v976 = vsel %vm793, %v974, %v950
        %v977 = vsel %vm793, %v975, %v951
        %v978 = vsel %vm787, %v888, %v956
        %v979 = vsel %vm787, %v889, %v957
        %v980 = vsel %vm790, %v978, %v962
        %v981 = vsel %vm790, %v979, %v963
        %v982 = vsel %vm793, %v980, %v968
        %v983 = vsel %vm793, %v981, %v969
        %985 = vset.pattern.permute.xlu0 0
        %986 = vperm.xlu0 %985, %v385
        %v987 = vpop.permute.xlu0 %986
        %v990 = vsel %vm807, %v384, 0
        %v993 = vsel %vm787, %v934, 0
        %v996 = vsel %vm787, %v935, 0
        %998 = vmatprep.subr.mxu0 %v977
        %999 = vmatpush1.msra.mxu0 %v976
        %1000 = vmatprep.subr.mxu0 %v983
        %1001 = vmatpush1.msra.mxu0 %v982
        %1002 = vmatprep.subr.mxu0 %v996
        %1003 = vmatpush1.msra.mxu0 %v993
        %1004 = vmatprep.subr.mxu0 0.0
        %1005 = vmatpush1.msra.mxu0 0.0
        %1006 = vmatprep.subr.mxu0 0.0
        %1007 = vmatpush1.msra.mxu0 0.0
        %1008 = vmatprep.subr.mxu0 0.0
        %1009 = vmatpush1.msra.mxu0 0.0
        %1010 = vmatprep.subr.mxu0 0.0
        %1011 = vmatpush1.msra.mxu0 0.0
        %1012 = vmatprep.subr.mxu0 0.0
        %1013 = vmatpush1.msra.mxu0 0.0
        %1014 = vmatprep.subr.mxu0 0.0
        %1015 = vmatpush1.msra.mxu0 0.0
        %1016 = vmatprep.subr.mxu0 0.0
        %1017 = vmatpush1.msra.mxu0 0.0
        %1018 = vmatprep.subr.mxu0 0.0
        %1019 = vmatpush1.msra.mxu0 0.0
        %1020 = vmatprep.subr.mxu0 0.0
        %1021 = vmatpush1.msra.mxu0 0.0
        %1022 = vmatprep.subr.mxu0 0.0
        %1023 = vmatpush1.msra.mxu0 0.0
        %1024 = vmatprep.subr.mxu0 0.0
        %1025 = vmatpush1.msra.mxu0 0.0
        %1026 = vmatprep.subr.mxu0 0.0
        %1027 = vmatpush1.msra.mxu0 0.0
        %1028 = vmatprep.subr.mxu0 0.0
        %1029 = vmatpush1.msra.mxu0 0.0
        %1030 = vmatprep.subr.mxu0 0.0
        %1031 = vmatpush1.msra.mxu0 0.0
        %1032 = vmatprep.subr.mxu0 0.0
        %1033 = vmatpush1.msra.mxu0 0.0
        %1034 = vmatprep.subr.mxu0 0.0
        %1035 = vmatpush1.msra.mxu0 0.0
        %1036 = vmatprep.subr.mxu0 0.0
        %1037 = vmatpush1.msra.mxu0 0.0
        %1038 = vmatprep.subr.mxu0 0.0
        %1039 = vmatpush1.msra.mxu0 0.0
        %1040 = vmatprep.subr.mxu0 0.0
        %1041 = vmatpush1.msra.mxu0 0.0
        %1042 = vmatprep.subr.mxu0 0.0
        %1043 = vmatpush1.msra.mxu0 0.0
        %1044 = vmatprep.subr.mxu0 0.0
        %1045 = vmatpush1.msra.mxu0 0.0
        %1046 = vmatprep.subr.mxu0 0.0
        %1047 = vmatpush1.msra.mxu0 0.0
        %1048 = vmatprep.subr.mxu0 0.0
        %1049 = vmatpush1.msra.mxu0 0.0
        %1050 = vmatprep.subr.mxu0 0.0
        %1051 = vmatpush1.msra.mxu0 0.0
        %1052 = vmatprep.subr.mxu0 0.0
        %1053 = vmatpush1.msra.mxu0 0.0
        %1054 = vmatprep.subr.mxu0 0.0
        %1055 = vmatpush1.msra.mxu0 0.0
        %1056 = vmatprep.subr.mxu0 0.0
        %1057 = vmatpush1.msra.mxu0 0.0
        %1058 = vmatprep.subr.mxu0 0.0
        %1059 = vmatpush1.msra.mxu0 0.0
        %1060 = vmatprep.subr.mxu0 0.0
        %1061 = vmatpush1.msra.mxu0 0.0
        %1062 = vmatprep.mubr.f32.mxu0 0.0
        %1063 = vmatmul.mubr.f32.gmra.mrb[0].mxu0 %v990
        %v1064 = vpop.f32.mrb[0].mxu0
        %v1065 = vadd.f32 %v987, %v1064
        %v1066 = vpop.f32.mrb[0].mxu0
        %v1067 = vadd.f32 %v987, %v1066
        %1068 = vdwg.mxu0
        %v1069 = vmax.f32 %v1065, 0.0
        %v1070 = vmax.f32 %v1067, 0.0
        %1072 = vset.pattern.permute.xlu0 0
        %1073 = vperm.xlu0 %1072, %v387
        %v1074 = vpop.permute.xlu0 %1073
        %v1076 = vlaneseq
        %v1077 = vshrl.u32 %v1076, 7
        %v1078 = vsub.s32 0, %v1077
        %v1079 = vrot.slane %v1074, %v1078
        %vm1080 = vcmask 15360
        %v1082 = vsel %vm1080, %v386, 0
        %v1085 = vsel %vm787, %v1069, 0
        %v1088 = vsel %vm787, %v1070, 0
        %1090 = vmatprep.subr.mxu0 %v1088
        %1091 = vmatpush1.msra.mxu0 %v1085
        %1092 = vmatprep.subr.mxu0 0.0
        %1093 = vmatpush1.msra.mxu0 0.0
        %1094 = vmatprep.subr.mxu0 0.0
        %1095 = vmatpush1.msra.mxu0 0.0
        %1096 = vmatprep.subr.mxu0 0.0
        %1097 = vmatpush1.msra.mxu0 0.0
        %1098 = vmatprep.subr.mxu0 0.0
        %1099 = vmatpush1.msra.mxu0 0.0
        %1100 = vmatprep.subr.mxu0 0.0
        %1101 = vmatpush1.msra.mxu0 0.0
        %1102 = vmatprep.subr.mxu0 0.0
        %1103 = vmatpush1.msra.mxu0 0.0
        %1104 = vmatprep.subr.mxu0 0.0
        %1105 = vmatpush1.msra.mxu0 0.0
        %1106 = vmatprep.subr.mxu0 0.0
        %1107 = vmatpush1.msra.mxu0 0.0
        %1108 = vmatprep.subr.mxu0 0.0
        %1109 = vmatpush1.msra.mxu0 0.0
        %1110 = vmatprep.subr.mxu0 0.0
        %1111 = vmatpush1.msra.mxu0 0.0
        %1112 = vmatprep.subr.mxu0 0.0
        %1113 = vmatpush1.msra.mxu0 0.0
        %1114 = vmatprep.subr.mxu0 0.0
        %1115 = vmatpush1.msra.mxu0 0.0
        %1116 = vmatprep.subr.mxu0 0.0
        %1117 = vmatpush1.msra.mxu0 0.0
        %1118 = vmatprep.subr.mxu0 0.0
        %1119 = vmatpush1.msra.mxu0 0.0
        %1120 = vmatprep.subr.mxu0 0.0
        %1121 = vmatpush1.msra.mxu0 0.0
        %1122 = vmatprep.subr.mxu0 0.0
        %1123 = vmatpush1.msra.mxu0 0.0
        %1124 = vmatprep.subr.mxu0 0.0
        %1125 = vmatpush1.msra.mxu0 0.0
        %1126 = vmatprep.subr.mxu0 0.0
        %1127 = vmatpush1.msra.mxu0 0.0
        %1128 = vmatprep.subr.mxu0 0.0
        %1129 = vmatpush1.msra.mxu0 0.0
        %1130 = vmatprep.subr.mxu0 0.0
        %1131 = vmatpush1.msra.mxu0 0.0
        %1132 = vmatprep.subr.mxu0 0.0
        %1133 = vmatpush1.msra.mxu0 0.0
        %1134 = vmatprep.subr.mxu0 0.0
        %1135 = vmatpush1.msra.mxu0 0.0
        %1136 = vmatprep.subr.mxu0 0.0
        %1137 = vmatpush1.msra.mxu0 0.0
        %1138 = vmatprep.subr.mxu0 0.0
        %1139 = vmatpush1.msra.mxu0 0.0
        %1140 = vmatprep.subr.mxu0 0.0
        %1141 = vmatpush1.msra.mxu0 0.0
        %1142 = vmatprep.subr.mxu0 0.0
        %1143 = vmatpush1.msra.mxu0 0.0
        %1144 = vmatprep.subr.mxu0 0.0
        %1145 = vmatpush1.msra.mxu0 0.0
        %1146 = vmatprep.subr.mxu0 0.0
        %1147 = vmatpush1.msra.mxu0 0.0
        %1148 = vmatprep.subr.mxu0 0.0
        %1149 = vmatpush1.msra.mxu0 0.0
        %1150 = vmatprep.subr.mxu0 0.0
        %1151 = vmatpush1.msra.mxu0 0.0
        %1152 = vmatprep.subr.mxu0 0.0
        %1153 = vmatpush1.msra.mxu0 0.0
        %1154 = vmatprep.mubr.f32.mxu0 0.0
        %1155 = vmatmul.mubr.f32.gmra.mrb[0].mxu0 %v1082
        %v1156 = vpop.f32.mrb[0].mxu0
        %v1157 = vadd.f32 %v1079, %v1156
        %v1158 = vpop.f32.mrb[0].mxu0
        %v1159 = vadd.f32 %v1079, %v1158
        %1160 = vdwg.mxu0
        %v1163 = vcombine.low %v1157, %v1159
        %v1165 = vunpack.c.l.s4 1966171168
        %v1166 = vunpack.c.0.s8 %v1165
        %v1167 = vlaneseq
        %v1168 = vshrl.u32 %v1167, 7
        %v1169 = vsub.s32 %v1166, %v1168
        %v1170 = vrot.slane %v1163, %v1169
        %v1172 = vunpack.c.l.s4 1966171168
        %v1173 = vunpack.c.0.s8 %v1172
        %v1174 = vlaneseq
        %v1175 = vshrl.u32 %v1174, 7
        %v1176 = vsub.s32 %v1173, %v1175
        %v1177 = vrot.slane %v1170, %v1176
        %v1179 = vlaneseq
        %vm1180 = vcmp.ge.s32.totalorder %v1179, 0
        %vm1181 = vcmp.lt.s32.totalorder %v1179, 256
        %vm1182 = vmand %vm1180, %vm1181
        %1183 = vst.msk [vmem:[%s379] sm:$0x3] %vm1182, %v1177
        %s1184 = sand.u32 %s252, 1
        %s1185 = scalar_lea.sflag [#allocation5], %s1184
        %s1186 = sand.u32 %s252, 1
        %s1187 = smul.addr %s1186, 2
        %s1188 = scalar_lea.vmem [#allocation6], %s1187
        // Predicated region
        $region65: #{tpu_custom_call.1} parent=59 // pred_check
          %p1189 = pneg %p262
        $region66: #{tpu_custom_call.1} parent=59 // pred_check_branch
          %1191 = sbr.rel (%p1189) target = $region68
        $region67: #{tpu_custom_call.1} parent=59 // pred_region
          %s1193 = ssub.s32 32, 32
          %1194 = vsyncadd %s1185, %s1193
          %s1195 = smul.addr %s29, 2
          %s1196 = smul.addr %s1195, 16
          %s1197 = scalar_lea.hbm %s10, %s1196
          %s1199 = sshll.u32 %s1188, 4
          %s1200 = int_to_ptr.vmem [resolvable:$true] %s1199
          %1202 = dma.vmem_to_hbm [thread:$0]  %s1200, 32, %s1197, %s1185
        $region68: #{tpu_custom_call.1} parent=59 // pred_fallthru
          _
      $region60: #{tpu_custom_call.1} parent=5 // pred_fallthru
        _
      %p1203 = scmp.le.s32.totalorder 2, %s24
      // Predicated region
      $region69: #{tpu_custom_call.1} parent=5 // pred_check
        %p1204 = pneg %p1203
      $region70: #{tpu_custom_call.1} parent=5 // pred_check_branch
        %1206 = sbr.rel (%p1204) target = $region72
      $region71: #{tpu_custom_call.1} parent=5 // pred_region
        %s1207 = ssub.s32 %s24, 2
        // Predicated region
        $region73: #{tpu_custom_call.1} parent=71 // pred_check
          %p1208 = pneg %p268
        $region74: #{tpu_custom_call.1} parent=71 // pred_check_branch
          %1210 = sbr.rel (%p1208) target = $region76
        $region75: #{tpu_custom_call.1} parent=71 // pred_region
          %s1211 = sand.u32 %s253, 1
          %s1212 = scalar_lea.sflag [#allocation5], %s1211
          %s1213 = sand.u32 %s253, 1
          %s1214 = smul.addr %s1213, 2
          %s1215 = scalar_lea.vmem [#allocation6], %s1214
          %1216 = dma.done %s1212, 32
        $region76: #{tpu_custom_call.1} parent=71 // pred_fallthru
          _
      $region72: #{tpu_custom_call.1} parent=5 // pred_fallthru
        _
    $region6: #{tpu_custom_call.1} parent=1 // loop_footer
      %s28 = sadd.s32 1, %s24
    $region7: #{tpu_custom_call.1} parent=1 // loop_footer_branch
      %23 = sbr.rel target = $region3
    $region8: #{tpu_custom_call.1} parent=1 // loop_exit
      _
    %1217 = vsyncpa [#allocation4], 1
    %s1218 = scalar_lea.sflag [#allocation4], 1
    %1219 = vsyncpa %s1218, 1
    %1220 = vsyncpa [#allocation5], 1
    %s1221 = scalar_lea.sflag [#allocation5], 1
    %1222 = vsyncpa %s1221, 1

</llo_original>
